<compile_context>
chip_gen: v5e
topology: v5e:2x2
jax: 0.10.0
libtpu: 0.0.40
codegen_flags: <defaults>
</compile_context>

<pallas_src>
import jax
import jax.numpy as jnp
from jax.experimental import pallas as pl
from jax.experimental.pallas import tpu as pltpu

# ----------------------------- small config ---------------------------------
B, S, M = 2, 8, 4          # batch, target seq len, memory (Q-Former) len
D, H, F = 32, 4, 64        # embed dim, num heads, feed-forward dim
HD = D // H                # head dim
V = 64                     # vocab size (synthetic)
MAX_SEQ = 16               # max_seq_len for positional embedding
NUM_LAYERS = 2
EPS = 1e-5

# const_slab row offsets (lane width D)
OFF_TOK = 0                       # [0, V)        token embedding table
OFF_POS = V                       # [V, V+B*S)    pre-tiled positional embeddings
OFF_MSK_S = V + B * S             # [.., +H*S)    self-attn head mask  (H*S, D)
OFF_MSK_M = OFF_MSK_S + H * S     # [.., +H*M)    cross-attn head mask (H*M, D)
CONST_ROWS = OFF_MSK_M + H * M    # = 128

# w_d column offsets (per layer, rows = D, lane width WD_COLS)
C_SA_QKV = 0                      # width 3D  (Wq pre-scaled by 1/sqrt(HD))
C_SA_WO = 3 * D                   # width D
C_CA_WQ = 4 * D                   # width D   (pre-scaled)
C_CA_KV = 5 * D                   # width 2D
C_CA_WO = 7 * D                   # width D
C_FF_W1 = 8 * D                   # width F
C_FC_W = 8 * D + F                # width V   (layer 0 only; layer 1 slot = 0)
WD_COLS = 8 * D + F + V           # = 384

# vec_slab row indices (per layer, lane width 128, leading lanes used)
R_SA_BQKV, R_SA_BO, R_LN1_G, R_LN1_B = 0, 1, 2, 3
R_CA_BQ, R_CA_BKV, R_CA_BO, R_LN2_G, R_LN2_B = 4, 5, 6, 7, 8
R_FF_B1, R_FF_B2, R_LN3_G, R_LN3_B = 9, 10, 11, 12
R_FC_B = 13                       # layer 0 only
N_VEC_ROWS = 16
VEC_LANES = 128


# ------------------------------ kernel helpers -------------------------------
def _layernorm(x, g, b):
    mu = jnp.mean(x, axis=-1, keepdims=True)
    var = jnp.mean((x - mu) ** 2, axis=-1, keepdims=True)
    return (x - mu) * jax.lax.rsqrt(var + EPS) * g + b


def _linear(x, w_bf16, b_f32):
    """x @ W + b with bf16 MXU operands and f32 accumulation."""
    return jnp.dot(x.astype(jnp.bfloat16), w_bf16,
                   preferred_element_type=jnp.float32) + b_f32


def _attend(q2d, k2d, v2d, L, mask_f32):
    """All-head attention with heads kept in lanes (no per-head slice / concat /
    transpose).

    q2d: (B*S, D) f32 (query proj, 1/sqrt(HD) already folded into Wq/bq)
    k2d, v2d: (B*L, D) f32 key/value projections
    mask_f32: (H*L, D) constant head selector, mask[h*L+k, h*HD+d] = 1.
    Returns (B*S, D) f32, heads already concatenated along lanes (ready for Wo).
    """
    HL = H * L
    mask_bf = mask_f32.astype(jnp.bfloat16)
    q3 = q2d.astype(jnp.bfloat16).reshape(B, S, D)
    k3 = k2d.astype(jnp.bfloat16).reshape(B, L, D)
    v3 = v2d.astype(jnp.bfloat16).reshape(B, L, D)
    # Head-expanded K/V: block h of rows carries only head-h lanes (zeros kill
    # all cross-head terms), so one batched einsum computes every head's scores.
    kexp = jnp.concatenate([k3] * H, axis=1) * mask_bf        # (B, H*L, D)
    vexp = jnp.concatenate([v3] * H, axis=1) * mask_bf        # (B, H*L, D)

    s = jnp.einsum("bqd,bkd->bqk", q3, kexp,
                   preferred_element_type=jnp.float32)        # (B, S, H*L)
    s2 = s.reshape(B * S, HL)
    # Global-row max stabilizer (subtracting any per-row constant is exact for
    # softmax); keeps the whole softmax to ONE pass over a (B*S, H*L) slab.
    p = jnp.exp(s2 - jnp.max(s2, axis=-1, keepdims=True))     # f32
    # Per-head denominator, broadcast to that head's output lanes in one matmul.
    denom = jnp.dot(p, mask_f32, preferred_element_type=jnp.float32)   # (B*S, D)

    o = jnp.einsum("bqk,bkd->bqd", p.astype(jnp.bfloat16).reshape(B, S, HL),
                   vexp, preferred_element_type=jnp.float32)  # (B, S, D)
    return o.reshape(B * S, D) * pl.reciprocal(denom, approx=True)


# ------------------------------ fused Pallas kernel --------------------------
def text_decoder_kernel(tok_ref, mem_ref, const_ref, wd_ref, wf2_ref, vec_ref,
                        out_ref):
    # --- token + positional embeddings (one-hot gather against VMEM table) ---
    tok = tok_ref[...]                                                # (B*S, 1) i32
    onehot = (jax.lax.broadcasted_iota(jnp.int32, (B * S, V), 1) == tok
              ).astype(jnp.float32)                                   # (B*S, V)
    x = jnp.dot(onehot, const_ref[OFF_TOK:OFF_TOK + V, :],
                preferred_element_type=jnp.float32)                   # (B*S, D)
    x = x + const_ref[OFF_POS:OFF_POS + B * S, :]                     # pre-tiled pos

    mem = mem_ref[...]                                                # (B*M, D) f32
    mask_s = const_ref[OFF_MSK_S:OFF_MSK_S + H * S, :]                # (H*S, D)
    mask_m = const_ref[OFF_MSK_M:OFF_MSK_M + H * M, :]                # (H*M, D)

    for l in range(NUM_LAYERS):                                       # static unroll
        wd = wd_ref[l]                                                # (D, 384) bf16
        vec = vec_ref[l]                                              # (16, 128) f32

        # ---- self-attention: fused QKV projection (1 MXU op), no tgt mask ----
        qkv = _linear(x, wd[:, C_SA_QKV:C_SA_QKV + 3 * D],
                      vec[R_SA_BQKV:R_SA_BQKV + 1, 0:3 * D])          # (B*S, 3D)
        sa = _attend(qkv[:, 0:D], qkv[:, D:2 * D], qkv[:, 2 * D:3 * D],
                     S, mask_s)
        sa = _linear(sa, wd[:, C_SA_WO:C_SA_WO + D],
                     vec[R_SA_BO:R_SA_BO + 1, 0:D])
        x = _layernorm(x + sa, vec[R_LN1_G:R_LN1_G + 1, 0:D],
                       vec[R_LN1_B:R_LN1_B + 1, 0:D])

        # ---- cross-attention over Q-Former memory: fused KV projection ----
        q = _linear(x, wd[:, C_CA_WQ:C_CA_WQ + D],
                    vec[R_CA_BQ:R_CA_BQ + 1, 0:D])
        kv = _linear(mem, wd[:, C_CA_KV:C_CA_KV + 2 * D],
                     vec[R_CA_BKV:R_CA_BKV + 1, 0:2 * D])             # (B*M, 2D)
        ca = _attend(q, kv[:, 0:D], kv[:, D:2 * D], M, mask_m)
        ca = _linear(ca, wd[:, C_CA_WO:C_CA_WO + D],
                     vec[R_CA_BO:R_CA_BO + 1, 0:D])
        x = _layernorm(x + ca, vec[R_LN2_G:R_LN2_G + 1, 0:D],
                       vec[R_LN2_B:R_LN2_B + 1, 0:D])

        # ---- feed-forward (ReLU), dropout = 0 (eval) ----
        h1 = jnp.maximum(
            _linear(x, wd[:, C_FF_W1:C_FF_W1 + F],
                    vec[R_FF_B1:R_FF_B1 + 1, 0:F]), 0.0)
        ff = _linear(h1, wf2_ref[l], vec[R_FF_B2:R_FF_B2 + 1, 0:D])
        x = _layernorm(x + ff, vec[R_LN3_G:R_LN3_G + 1, 0:D],
                       vec[R_LN3_B:R_LN3_B + 1, 0:D])

    # ---- vocab projection: lane-dense 2-D (B*S, V) store, reshape in wrapper ----
    out_ref[...] = _linear(x, wd_ref[0][:, C_FC_W:C_FC_W + V],
                           vec_ref[0][R_FC_B:R_FC_B + 1, 0:V])


# ------------------------------ wrapper --------------------------------------
def text_decoder_forward(tgt_tokens, memory, params):
    """tgt_tokens: (B, S) int32; memory: (B, M, D) f32 -> logits (B, S, V)."""
    tok2d = tgt_tokens.reshape(B * S, 1).astype(jnp.int32)   # free metadata reshape
    mem2d = memory.reshape(B * M, D)                         # free metadata reshape
    inputs = [tok2d, mem2d, params["const_slab"], params["w_d"],
              params["w_f2"], params["vec_slab"]]
    vmem = lambda: pl.BlockSpec(memory_space=pltpu.MemorySpace.VMEM)
    logits2d = pl.pallas_call(
        text_decoder_kernel,
        out_shape=jax.ShapeDtypeStruct((B * S, V), jnp.float32),
        in_specs=[vmem() for _ in inputs],
        out_specs=vmem(),
    )(*inputs)
    return logits2d.reshape(B, S, V)


# ------------------------------ parameters -----------------------------------
def _head_mask(L):
    """(H*L, D) selector: mask[h*L+k, h*HD+d] = 1, else 0."""
    r = jnp.arange(H * L)[:, None] // L
    c = jnp.arange(D)[None, :] // HD
    return (r == c).astype(jnp.float32)


def _row(v):
    v = jnp.asarray(v, jnp.float32).reshape(-1)
    return jnp.pad(v, (0, VEC_LANES - v.shape[0]))


def init_params(key):
    """Kernel-ready packed parameters (packing done once at init, not per call)."""
    keys = iter(jax.random.split(key, 64))
    rnd = lambda shape: 0.05 * jax.random.normal(next(keys), shape, jnp.float32)
    zeros = lambda n: jnp.zeros((n,), jnp.float32)
    ones = lambda n: jnp.ones((n,), jnp.float32)
    q_scale = 1.0 / (HD ** 0.5)

    tok_emb = rnd((V, D))
    pos_emb = rnd((MAX_SEQ, D))
    fc_w = rnd((D, V))
    fc_b = zeros(V)

    const_slab = jnp.concatenate([
        tok_emb,
        jnp.tile(pos_emb[:S], (B, 1)),        # positions pre-tiled to the (B*S, D) slab
        _head_mask(S),
        _head_mask(M),
    ], axis=0)                                # (128, D) f32
    assert const_slab.shape == (CONST_ROWS, D)

    wd_layers, wf2_layers, vec_layers = [], [], []
    for l in range(NUM_LAYERS):
        sa_wq, sa_wk, sa_wv, sa_wo = rnd((D, D)), rnd((D, D)), rnd((D, D)), rnd((D, D))
        ca_wq, ca_wk, ca_wv, ca_wo = rnd((D, D)), rnd((D, D)), rnd((D, D)), rnd((D, D))
        ff_w1, ff_w2 = rnd((D, F)), rnd((F, D))
        sa_bq, sa_bk, sa_bv, sa_bo = zeros(D), zeros(D), zeros(D), zeros(D)
        ca_bq, ca_bk, ca_bv, ca_bo = zeros(D), zeros(D), zeros(D), zeros(D)
        ff_b1, ff_b2 = zeros(F), zeros(D)
        ln1_g, ln1_b = ones(D), zeros(D)
        ln2_g, ln2_b = ones(D), zeros(D)
        ln3_g, ln3_b = ones(D), zeros(D)

        # 1/sqrt(HD) scale folded into BOTH Wq and bq: s*(xW+b) == x(sW)+(sb),
        # exact even for nonzero query biases.
        wd = jnp.concatenate([
            sa_wq * q_scale, sa_wk, sa_wv,                    # fused QKV
            sa_wo,
            ca_wq * q_scale,
            ca_wk, ca_wv,                                     # fused KV
            ca_wo,
            ff_w1,
            fc_w if l == 0 else jnp.zeros((D, V), jnp.float32),
        ], axis=1)                                            # (D, 384)
        assert wd.shape == (D, WD_COLS)
        wd_layers.append(wd)
        wf2_layers.append(ff_w2)

        rows = [
            jnp.concatenate([sa_bq * q_scale, sa_bk, sa_bv]),  # R_SA_BQKV
            sa_bo, ln1_g, ln1_b,
            ca_bq * q_scale,
            jnp.concatenate([ca_bk, ca_bv]),                   # R_CA_BKV
            ca_bo, ln2_g, ln2_b,
            ff_b1, ff_b2, ln3_g, ln3_b,
            fc_b if l == 0 else zeros(V),                      # R_FC_B
            zeros(1), zeros(1),                                # pad to N_VEC_ROWS
        ]
        vec_layers.append(jnp.stack([_row(r) for r in rows]))  # (16, 128)

    return {
        "const_slab": const_slab,                              # f32
        "w_d": jnp.stack(wd_layers).astype(jnp.bfloat16),      # (L, D, 384) bf16
        "w_f2": jnp.stack(wf2_layers).astype(jnp.bfloat16),    # (L, F, D)   bf16
        "vec_slab": jnp.stack(vec_layers),                     # (L, 16, 128) f32
    }


# ------------------------------ main ------------------------------------------
if __name__ == "__main__":
    key = jax.random.PRNGKey(0)
    k_tok, k_mem, k_par = jax.random.split(key, 3)

    tgt_tokens = jax.random.randint(k_tok, (B, S), 0, V, dtype=jnp.int32)
    memory = jax.random.normal(k_mem, (B, M, D), dtype=jnp.float32)
    params = init_params(k_par)

    logits = jax.block_until_ready(text_decoder_forward(tgt_tokens, memory, params))

    assert logits.shape == (B, S, V), logits.shape
    assert bool(jnp.all(jnp.isfinite(logits)))
    print("KERNEL_OK")
</pallas_src>

<mosaic_0001>
module attributes {stable_mosaic.version = 11 : i64} {
  func.func @text_decoder_kernel(%arg0: memref<16x1xi32, #tpu.memory_space<vmem>>, %arg1: memref<8x32xf32, #tpu.memory_space<vmem>>, %arg2: memref<128x32xf32, #tpu.memory_space<vmem>>, %arg3: memref<2x32x384xbf16, #tpu.memory_space<vmem>>, %arg4: memref<2x64x32xbf16, #tpu.memory_space<vmem>>, %arg5: memref<2x16x128xf32, #tpu.memory_space<vmem>>, %arg6: memref<16x64xf32, #tpu.memory_space<vmem>>) attributes {dimension_semantics = [], scalar_prefetch = 0 : i64, scratch_operands = 0 : i64, tpu.core_type = #tpu.core_type<tc>} {
    %c0 = arith.constant 0 : index
    %c0_0 = arith.constant 0 : index
    %0 = vector.load %arg0[%c0, %c0_0] : memref<16x1xi32, #tpu.memory_space<vmem>>, vector<16x1xi32>
    %1 = tpu.iota {dimensions = array<i32: 1>} : vector<16x64xi32>
    %2 = vector.broadcast %0 : vector<16x1xi32> to vector<16x64xi32>
    %3 = arith.cmpi eq, %1, %2 : vector<16x64xi32>
    %4 = arith.extui %3 : vector<16x64xi1> to vector<16x64xi32>
    %5 = arith.sitofp %4 : vector<16x64xi32> to vector<16x64xf32>
    %c0_1 = arith.constant 0 : index
    %c0_2 = arith.constant 0 : index
    %6 = vector.load %arg2[%c0_1, %c0_2] : memref<128x32xf32, #tpu.memory_space<vmem>>, vector<64x32xf32>
    %cst = arith.constant dense<0.000000e+00> : vector<16x32xf32>
    %7 = tpu.matmul %5, %6, %cst {dimension_numbers = #tpu.dot_dimension_numbers<[1], [0], [0], [1], [0, 0, 1, 1], [], []>} : vector<16x64xf32>, vector<64x32xf32>, vector<16x32xf32> -> vector<16x32xf32>
    %c64 = arith.constant 64 : index
    %c0_3 = arith.constant 0 : index
    %8 = vector.load %arg2[%c64, %c0_3] : memref<128x32xf32, #tpu.memory_space<vmem>>, vector<16x32xf32>
    %9 = arith.addf %7, %8 : vector<16x32xf32>
    %c0_4 = arith.constant 0 : index
    %c0_5 = arith.constant 0 : index
    %10 = vector.load %arg1[%c0_4, %c0_5] : memref<8x32xf32, #tpu.memory_space<vmem>>, vector<8x32xf32>
    %c80 = arith.constant 80 : index
    %c0_6 = arith.constant 0 : index
    %11 = vector.load %arg2[%c80, %c0_6] : memref<128x32xf32, #tpu.memory_space<vmem>>, vector<32x32xf32>
    %c112 = arith.constant 112 : index
    %c0_7 = arith.constant 0 : index
    %12 = vector.load %arg2[%c112, %c0_7] : memref<128x32xf32, #tpu.memory_space<vmem>>, vector<16x32xf32>
    %c0_8 = arith.constant 0 : index
    %c0_9 = arith.constant 0 : index
    %c0_10 = arith.constant 0 : index
    %13 = vector.load %arg3[%c0_8, %c0_9, %c0_10] : memref<2x32x384xbf16, #tpu.memory_space<vmem>>, vector<1x32x384xbf16>
    %14 = vector.shape_cast %13 : vector<1x32x384xbf16> to vector<32x384xbf16>
    %c0_11 = arith.constant 0 : index
    %c0_12 = arith.constant 0 : index
    %c0_13 = arith.constant 0 : index
    %15 = vector.load %arg5[%c0_11, %c0_12, %c0_13] : memref<2x16x128xf32, #tpu.memory_space<vmem>>, vector<1x16x128xf32>
    %16 = vector.shape_cast %15 : vector<1x16x128xf32> to vector<16x128xf32>
    %17 = vector.extract_strided_slice %14 {offsets = [0, 0], sizes = [32, 96], strides = [1, 1]} : vector<32x384xbf16> to vector<32x96xbf16>
    %18 = vector.extract_strided_slice %16 {offsets = [0, 0], sizes = [1, 96], strides = [1, 1]} : vector<16x128xf32> to vector<1x96xf32>
    %19 = arith.truncf %9 : vector<16x32xf32> to vector<16x32xbf16>
    %cst_14 = arith.constant dense<0.000000e+00> : vector<16x96xf32>
    %20 = tpu.matmul %19, %17, %cst_14 {dimension_numbers = #tpu.dot_dimension_numbers<[1], [0], [0], [1], [0, 0, 1, 1], [], []>} : vector<16x32xbf16>, vector<32x96xbf16>, vector<16x96xf32> -> vector<16x96xf32>
    %21 = vector.broadcast %18 : vector<1x96xf32> to vector<16x96xf32>
    %22 = arith.addf %20, %21 : vector<16x96xf32>
    %23 = vector.extract_strided_slice %22 {offsets = [0, 0], sizes = [16, 32], strides = [1, 1]} : vector<16x96xf32> to vector<16x32xf32>
    %24 = vector.extract_strided_slice %22 {offsets = [0, 32], sizes = [16, 32], strides = [1, 1]} : vector<16x96xf32> to vector<16x32xf32>
    %25 = vector.extract_strided_slice %22 {offsets = [0, 64], sizes = [16, 32], strides = [1, 1]} : vector<16x96xf32> to vector<16x32xf32>
    %26 = arith.truncf %11 : vector<32x32xf32> to vector<32x32xbf16>
    %27 = arith.truncf %23 : vector<16x32xf32> to vector<16x32xbf16>
    %28 = vector.shape_cast %27 : vector<16x32xbf16> to vector<2x8x32xbf16>
    %29 = arith.truncf %24 : vector<16x32xf32> to vector<16x32xbf16>
    %30 = vector.shape_cast %29 : vector<16x32xbf16> to vector<2x8x32xbf16>
    %31 = arith.truncf %25 : vector<16x32xf32> to vector<16x32xbf16>
    %32 = vector.shape_cast %31 : vector<16x32xbf16> to vector<2x8x32xbf16>
    %33 = tpu.concatenate %30, %30, %30, %30 in 1 : vector<2x8x32xbf16>, vector<2x8x32xbf16>, vector<2x8x32xbf16>, vector<2x8x32xbf16> -> vector<2x32x32xbf16>
    %34 = vector.shape_cast %26 : vector<32x32xbf16> to vector<1x32x32xbf16>
    %35 = vector.broadcast %34 : vector<1x32x32xbf16> to vector<2x32x32xbf16>
    %36 = arith.mulf %33, %35 : vector<2x32x32xbf16>
    %37 = tpu.concatenate %32, %32, %32, %32 in 1 : vector<2x8x32xbf16>, vector<2x8x32xbf16>, vector<2x8x32xbf16>, vector<2x8x32xbf16> -> vector<2x32x32xbf16>
    %38 = vector.shape_cast %26 : vector<32x32xbf16> to vector<1x32x32xbf16>
    %39 = vector.broadcast %38 : vector<1x32x32xbf16> to vector<2x32x32xbf16>
    %40 = arith.mulf %37, %39 : vector<2x32x32xbf16>
    "tpu.trace_start"() <{level = 10 : i32, message = "bqd,bkd->bqk"}> : () -> ()
    %cst_15 = arith.constant dense<0.000000e+00> : vector<2x8x32xf32>
    %41 = tpu.matmul %28, %36, %cst_15 {dimension_numbers = #tpu.dot_dimension_numbers<[2], [2], [1], [1], [0, 0, 0, 1, 1, 1], [0], [0]>} : vector<2x8x32xbf16>, vector<2x32x32xbf16>, vector<2x8x32xf32> -> vector<2x8x32xf32>
    "tpu.trace_stop"() : () -> ()
    %42 = vector.shape_cast %41 : vector<2x8x32xf32> to vector<16x32xf32>
    %cst_16 = arith.constant dense<0xFF800000> : vector<16xf32>
    %43 = vector.multi_reduction <maximumf>, %42, %cst_16 [1] : vector<16x32xf32> to vector<16xf32>
    %44 = vector.shape_cast %43 : vector<16xf32> to vector<16x1xf32>
    %45 = vector.broadcast %44 : vector<16x1xf32> to vector<16x32xf32>
    %46 = arith.subf %42, %45 : vector<16x32xf32>
    %47 = math.exp %46 : vector<16x32xf32>
    %cst_17 = arith.constant dense<0.000000e+00> : vector<16x32xf32>
    %48 = tpu.matmul %47, %11, %cst_17 {dimension_numbers = #tpu.dot_dimension_numbers<[1], [0], [0], [1], [0, 0, 1, 1], [], []>} : vector<16x32xf32>, vector<32x32xf32>, vector<16x32xf32> -> vector<16x32xf32>
    %49 = arith.truncf %47 : vector<16x32xf32> to vector<16x32xbf16>
    %50 = vector.shape_cast %49 : vector<16x32xbf16> to vector<2x8x32xbf16>
    "tpu.trace_start"() <{level = 10 : i32, message = "bqk,bkd->bqd"}> : () -> ()
    %cst_18 = arith.constant dense<0.000000e+00> : vector<2x8x32xf32>
    %51 = tpu.matmul %50, %40, %cst_18 {dimension_numbers = #tpu.dot_dimension_numbers<[2], [1], [1], [2], [0, 0, 0, 1, 1, 2], [0], [0]>} : vector<2x8x32xbf16>, vector<2x32x32xbf16>, vector<2x8x32xf32> -> vector<2x8x32xf32>
    "tpu.trace_stop"() : () -> ()
    %52 = vector.shape_cast %51 : vector<2x8x32xf32> to vector<16x32xf32>
    %53 = tpu.reciprocal %48 {approx = true} : vector<16x32xf32> -> vector<16x32xf32>
    %54 = arith.mulf %52, %53 : vector<16x32xf32>
    %55 = vector.extract_strided_slice %14 {offsets = [0, 96], sizes = [32, 32], strides = [1, 1]} : vector<32x384xbf16> to vector<32x32xbf16>
    %56 = vector.extract_strided_slice %16 {offsets = [1, 0], sizes = [1, 32], strides = [1, 1]} : vector<16x128xf32> to vector<1x32xf32>
    %57 = arith.truncf %54 : vector<16x32xf32> to vector<16x32xbf16>
    %cst_19 = arith.constant dense<0.000000e+00> : vector<16x32xf32>
    %58 = tpu.matmul %57, %55, %cst_19 {dimension_numbers = #tpu.dot_dimension_numbers<[1], [0], [0], [1], [0, 0, 1, 1], [], []>} : vector<16x32xbf16>, vector<32x32xbf16>, vector<16x32xf32> -> vector<16x32xf32>
    %59 = vector.broadcast %56 : vector<1x32xf32> to vector<16x32xf32>
    %60 = arith.addf %58, %59 : vector<16x32xf32>
    %61 = arith.addf %9, %60 : vector<16x32xf32>
    %62 = vector.extract_strided_slice %16 {offsets = [2, 0], sizes = [1, 32], strides = [1, 1]} : vector<16x128xf32> to vector<1x32xf32>
    %63 = vector.extract_strided_slice %16 {offsets = [3, 0], sizes = [1, 32], strides = [1, 1]} : vector<16x128xf32> to vector<1x32xf32>
    %cst_20 = arith.constant dense<0.000000e+00> : vector<16xf32>
    %64 = vector.multi_reduction <add>, %61, %cst_20 [1] : vector<16x32xf32> to vector<16xf32>
    %65 = vector.shape_cast %64 : vector<16xf32> to vector<16x1xf32>
    %cst_21 = arith.constant 3.200000e+01 : f32
    %66 = vector.broadcast %cst_21 : f32 to vector<16x1xf32>
    %67 = arith.divf %65, %66 : vector<16x1xf32>
    %68 = vector.broadcast %67 : vector<16x1xf32> to vector<16x32xf32>
    %69 = arith.subf %61, %68 : vector<16x32xf32>
    %70 = arith.mulf %69, %69 : vector<16x32xf32>
    %cst_22 = arith.constant dense<0.000000e+00> : vector<16xf32>
    %71 = vector.multi_reduction <add>, %70, %cst_22 [1] : vector<16x32xf32> to vector<16xf32>
    %72 = vector.shape_cast %71 : vector<16xf32> to vector<16x1xf32>
    %cst_23 = arith.constant 3.200000e+01 : f32
    %73 = vector.broadcast %cst_23 : f32 to vector<16x1xf32>
    %74 = arith.divf %72, %73 : vector<16x1xf32>
    %75 = vector.broadcast %67 : vector<16x1xf32> to vector<16x32xf32>
    %76 = arith.subf %61, %75 : vector<16x32xf32>
    %cst_24 = arith.constant 9.99999974E-6 : f32
    %77 = vector.broadcast %cst_24 : f32 to vector<16x1xf32>
    %78 = arith.addf %74, %77 : vector<16x1xf32>
    %79 = math.rsqrt %78 : vector<16x1xf32>
    %80 = vector.broadcast %79 : vector<16x1xf32> to vector<16x32xf32>
    %81 = arith.mulf %76, %80 : vector<16x32xf32>
    %82 = vector.broadcast %62 : vector<1x32xf32> to vector<16x32xf32>
    %83 = arith.mulf %81, %82 : vector<16x32xf32>
    %84 = vector.broadcast %63 : vector<1x32xf32> to vector<16x32xf32>
    %85 = arith.addf %83, %84 : vector<16x32xf32>
    %86 = vector.extract_strided_slice %14 {offsets = [0, 128], sizes = [32, 32], strides = [1, 1]} : vector<32x384xbf16> to vector<32x32xbf16>
    %87 = vector.extract_strided_slice %16 {offsets = [4, 0], sizes = [1, 32], strides = [1, 1]} : vector<16x128xf32> to vector<1x32xf32>
    %88 = arith.truncf %85 : vector<16x32xf32> to vector<16x32xbf16>
    %cst_25 = arith.constant dense<0.000000e+00> : vector<16x32xf32>
    %89 = tpu.matmul %88, %86, %cst_25 {dimension_numbers = #tpu.dot_dimension_numbers<[1], [0], [0], [1], [0, 0, 1, 1], [], []>} : vector<16x32xbf16>, vector<32x32xbf16>, vector<16x32xf32> -> vector<16x32xf32>
    %90 = vector.broadcast %87 : vector<1x32xf32> to vector<16x32xf32>
    %91 = arith.addf %89, %90 : vector<16x32xf32>
    %92 = vector.extract_strided_slice %14 {offsets = [0, 160], sizes = [32, 64], strides = [1, 1]} : vector<32x384xbf16> to vector<32x64xbf16>
    %93 = vector.extract_strided_slice %16 {offsets = [5, 0], sizes = [1, 64], strides = [1, 1]} : vector<16x128xf32> to vector<1x64xf32>
    %94 = arith.truncf %10 : vector<8x32xf32> to vector<8x32xbf16>
    %cst_26 = arith.constant dense<0.000000e+00> : vector<8x64xf32>
    %95 = tpu.matmul %94, %92, %cst_26 {dimension_numbers = #tpu.dot_dimension_numbers<[1], [0], [0], [1], [0, 0, 1, 1], [], []>} : vector<8x32xbf16>, vector<32x64xbf16>, vector<8x64xf32> -> vector<8x64xf32>
    %96 = vector.broadcast %93 : vector<1x64xf32> to vector<8x64xf32>
    %97 = arith.addf %95, %96 : vector<8x64xf32>
    %98 = vector.extract_strided_slice %97 {offsets = [0, 0], sizes = [8, 32], strides = [1, 1]} : vector<8x64xf32> to vector<8x32xf32>
    %99 = vector.extract_strided_slice %97 {offsets = [0, 32], sizes = [8, 32], strides = [1, 1]} : vector<8x64xf32> to vector<8x32xf32>
    %100 = arith.truncf %12 : vector<16x32xf32> to vector<16x32xbf16>
    %101 = arith.truncf %91 : vector<16x32xf32> to vector<16x32xbf16>
    %102 = vector.shape_cast %101 : vector<16x32xbf16> to vector<2x8x32xbf16>
    %103 = arith.truncf %98 : vector<8x32xf32> to vector<8x32xbf16>
    %104 = vector.shape_cast %103 : vector<8x32xbf16> to vector<2x4x32xbf16>
    %105 = arith.truncf %99 : vector<8x32xf32> to vector<8x32xbf16>
    %106 = vector.shape_cast %105 : vector<8x32xbf16> to vector<2x4x32xbf16>
    %107 = tpu.concatenate %104, %104, %104, %104 in 1 : vector<2x4x32xbf16>, vector<2x4x32xbf16>, vector<2x4x32xbf16>, vector<2x4x32xbf16> -> vector<2x16x32xbf16>
    %108 = vector.shape_cast %100 : vector<16x32xbf16> to vector<1x16x32xbf16>
    %109 = vector.broadcast %108 : vector<1x16x32xbf16> to vector<2x16x32xbf16>
    %110 = arith.mulf %107, %109 : vector<2x16x32xbf16>
    %111 = tpu.concatenate %106, %106, %106, %106 in 1 : vector<2x4x32xbf16>, vector<2x4x32xbf16>, vector<2x4x32xbf16>, vector<2x4x32xbf16> -> vector<2x16x32xbf16>
    %112 = vector.shape_cast %100 : vector<16x32xbf16> to vector<1x16x32xbf16>
    %113 = vector.broadcast %112 : vector<1x16x32xbf16> to vector<2x16x32xbf16>
    %114 = arith.mulf %111, %113 : vector<2x16x32xbf16>
    "tpu.trace_start"() <{level = 10 : i32, message = "bqd,bkd->bqk"}> : () -> ()
    %cst_27 = arith.constant dense<0.000000e+00> : vector<2x8x16xf32>
    %115 = tpu.matmul %102, %110, %cst_27 {dimension_numbers = #tpu.dot_dimension_numbers<[2], [2], [1], [1], [0, 0, 0, 1, 1, 1], [0], [0]>} : vector<2x8x32xbf16>, vector<2x16x32xbf16>, vector<2x8x16xf32> -> vector<2x8x16xf32>
    "tpu.trace_stop"() : () -> ()
    %116 = vector.shape_cast %115 : vector<2x8x16xf32> to vector<16x16xf32>
    %cst_28 = arith.constant dense<0xFF800000> : vector<16xf32>
    %117 = vector.multi_reduction <maximumf>, %116, %cst_28 [1] : vector<16x16xf32> to vector<16xf32>
    %118 = vector.shape_cast %117 : vector<16xf32> to vector<16x1xf32>
    %119 = vector.broadcast %118 : vector<16x1xf32> to vector<16x16xf32>
    %120 = arith.subf %116, %119 : vector<16x16xf32>
    %121 = math.exp %120 : vector<16x16xf32>
    %cst_29 = arith.constant dense<0.000000e+00> : vector<16x32xf32>
    %122 = tpu.matmul %121, %12, %cst_29 {dimension_numbers = #tpu.dot_dimension_numbers<[1], [0], [0], [1], [0, 0, 1, 1], [], []>} : vector<16x16xf32>, vector<16x32xf32>, vector<16x32xf32> -> vector<16x32xf32>
    %123 = arith.truncf %121 : vector<16x16xf32> to vector<16x16xbf16>
    %124 = vector.shape_cast %123 : vector<16x16xbf16> to vector<2x8x16xbf16>
    "tpu.trace_start"() <{level = 10 : i32, message = "bqk,bkd->bqd"}> : () -> ()
    %cst_30 = arith.constant dense<0.000000e+00> : vector<2x8x32xf32>
    %125 = tpu.matmul %124, %114, %cst_30 {dimension_numbers = #tpu.dot_dimension_numbers<[2], [1], [1], [2], [0, 0, 0, 1, 1, 2], [0], [0]>} : vector<2x8x16xbf16>, vector<2x16x32xbf16>, vector<2x8x32xf32> -> vector<2x8x32xf32>
    "tpu.trace_stop"() : () -> ()
    %126 = vector.shape_cast %125 : vector<2x8x32xf32> to vector<16x32xf32>
    %127 = tpu.reciprocal %122 {approx = true} : vector<16x32xf32> -> vector<16x32xf32>
    %128 = arith.mulf %126, %127 : vector<16x32xf32>
    %129 = vector.extract_strided_slice %14 {offsets = [0, 224], sizes = [32, 32], strides = [1, 1]} : vector<32x384xbf16> to vector<32x32xbf16>
    %130 = vector.extract_strided_slice %16 {offsets = [6, 0], sizes = [1, 32], strides = [1, 1]} : vector<16x128xf32> to vector<1x32xf32>
    %131 = arith.truncf %128 : vector<16x32xf32> to vector<16x32xbf16>
    %cst_31 = arith.constant dense<0.000000e+00> : vector<16x32xf32>
    %132 = tpu.matmul %131, %129, %cst_31 {dimension_numbers = #tpu.dot_dimension_numbers<[1], [0], [0], [1], [0, 0, 1, 1], [], []>} : vector<16x32xbf16>, vector<32x32xbf16>, vector<16x32xf32> -> vector<16x32xf32>
    %133 = vector.broadcast %130 : vector<1x32xf32> to vector<16x32xf32>
    %134 = arith.addf %132, %133 : vector<16x32xf32>
    %135 = arith.addf %85, %134 : vector<16x32xf32>
    %136 = vector.extract_strided_slice %16 {offsets = [7, 0], sizes = [1, 32], strides = [1, 1]} : vector<16x128xf32> to vector<1x32xf32>
    %137 = vector.extract_strided_slice %16 {offsets = [8, 0], sizes = [1, 32], strides = [1, 1]} : vector<16x128xf32> to vector<1x32xf32>
    %cst_32 = arith.constant dense<0.000000e+00> : vector<16xf32>
    %138 = vector.multi_reduction <add>, %135, %cst_32 [1] : vector<16x32xf32> to vector<16xf32>
    %139 = vector.shape_cast %138 : vector<16xf32> to vector<16x1xf32>
    %cst_33 = arith.constant 3.200000e+01 : f32
    %140 = vector.broadcast %cst_33 : f32 to vector<16x1xf32>
    %141 = arith.divf %139, %140 : vector<16x1xf32>
    %142 = vector.broadcast %141 : vector<16x1xf32> to vector<16x32xf32>
    %143 = arith.subf %135, %142 : vector<16x32xf32>
    %144 = arith.mulf %143, %143 : vector<16x32xf32>
    %cst_34 = arith.constant dense<0.000000e+00> : vector<16xf32>
    %145 = vector.multi_reduction <add>, %144, %cst_34 [1] : vector<16x32xf32> to vector<16xf32>
    %146 = vector.shape_cast %145 : vector<16xf32> to vector<16x1xf32>
    %cst_35 = arith.constant 3.200000e+01 : f32
    %147 = vector.broadcast %cst_35 : f32 to vector<16x1xf32>
    %148 = arith.divf %146, %147 : vector<16x1xf32>
    %149 = vector.broadcast %141 : vector<16x1xf32> to vector<16x32xf32>
    %150 = arith.subf %135, %149 : vector<16x32xf32>
    %cst_36 = arith.constant 9.99999974E-6 : f32
    %151 = vector.broadcast %cst_36 : f32 to vector<16x1xf32>
    %152 = arith.addf %148, %151 : vector<16x1xf32>
    %153 = math.rsqrt %152 : vector<16x1xf32>
    %154 = vector.broadcast %153 : vector<16x1xf32> to vector<16x32xf32>
    %155 = arith.mulf %150, %154 : vector<16x32xf32>
    %156 = vector.broadcast %136 : vector<1x32xf32> to vector<16x32xf32>
    %157 = arith.mulf %155, %156 : vector<16x32xf32>
    %158 = vector.broadcast %137 : vector<1x32xf32> to vector<16x32xf32>
    %159 = arith.addf %157, %158 : vector<16x32xf32>
    %160 = vector.extract_strided_slice %14 {offsets = [0, 256], sizes = [32, 64], strides = [1, 1]} : vector<32x384xbf16> to vector<32x64xbf16>
    %161 = vector.extract_strided_slice %16 {offsets = [9, 0], sizes = [1, 64], strides = [1, 1]} : vector<16x128xf32> to vector<1x64xf32>
    %162 = arith.truncf %159 : vector<16x32xf32> to vector<16x32xbf16>
    %cst_37 = arith.constant dense<0.000000e+00> : vector<16x64xf32>
    %163 = tpu.matmul %162, %160, %cst_37 {dimension_numbers = #tpu.dot_dimension_numbers<[1], [0], [0], [1], [0, 0, 1, 1], [], []>} : vector<16x32xbf16>, vector<32x64xbf16>, vector<16x64xf32> -> vector<16x64xf32>
    %164 = vector.broadcast %161 : vector<1x64xf32> to vector<16x64xf32>
    %165 = arith.addf %163, %164 : vector<16x64xf32>
    %cst_38 = arith.constant 0.000000e+00 : f32
    %166 = vector.broadcast %cst_38 : f32 to vector<16x64xf32>
    %167 = arith.maximumf %165, %166 : vector<16x64xf32>
    %c0_39 = arith.constant 0 : index
    %c0_40 = arith.constant 0 : index
    %c0_41 = arith.constant 0 : index
    %168 = vector.load %arg4[%c0_39, %c0_40, %c0_41] : memref<2x64x32xbf16, #tpu.memory_space<vmem>>, vector<1x64x32xbf16>
    %169 = vector.shape_cast %168 : vector<1x64x32xbf16> to vector<64x32xbf16>
    %170 = vector.extract_strided_slice %16 {offsets = [10, 0], sizes = [1, 32], strides = [1, 1]} : vector<16x128xf32> to vector<1x32xf32>
    %171 = arith.truncf %167 : vector<16x64xf32> to vector<16x64xbf16>
    %cst_42 = arith.constant dense<0.000000e+00> : vector<16x32xf32>
    %172 = tpu.matmul %171, %169, %cst_42 {dimension_numbers = #tpu.dot_dimension_numbers<[1], [0], [0], [1], [0, 0, 1, 1], [], []>} : vector<16x64xbf16>, vector<64x32xbf16>, vector<16x32xf32> -> vector<16x32xf32>
    %173 = vector.broadcast %170 : vector<1x32xf32> to vector<16x32xf32>
    %174 = arith.addf %172, %173 : vector<16x32xf32>
    %175 = arith.addf %159, %174 : vector<16x32xf32>
    %176 = vector.extract_strided_slice %16 {offsets = [11, 0], sizes = [1, 32], strides = [1, 1]} : vector<16x128xf32> to vector<1x32xf32>
    %177 = vector.extract_strided_slice %16 {offsets = [12, 0], sizes = [1, 32], strides = [1, 1]} : vector<16x128xf32> to vector<1x32xf32>
    %cst_43 = arith.constant dense<0.000000e+00> : vector<16xf32>
    %178 = vector.multi_reduction <add>, %175, %cst_43 [1] : vector<16x32xf32> to vector<16xf32>
    %179 = vector.shape_cast %178 : vector<16xf32> to vector<16x1xf32>
    %cst_44 = arith.constant 3.200000e+01 : f32
    %180 = vector.broadcast %cst_44 : f32 to vector<16x1xf32>
    %181 = arith.divf %179, %180 : vector<16x1xf32>
    %182 = vector.broadcast %181 : vector<16x1xf32> to vector<16x32xf32>
    %183 = arith.subf %175, %182 : vector<16x32xf32>
    %184 = arith.mulf %183, %183 : vector<16x32xf32>
    %cst_45 = arith.constant dense<0.000000e+00> : vector<16xf32>
    %185 = vector.multi_reduction <add>, %184, %cst_45 [1] : vector<16x32xf32> to vector<16xf32>
    %186 = vector.shape_cast %185 : vector<16xf32> to vector<16x1xf32>
    %cst_46 = arith.constant 3.200000e+01 : f32
    %187 = vector.broadcast %cst_46 : f32 to vector<16x1xf32>
    %188 = arith.divf %186, %187 : vector<16x1xf32>
    %189 = vector.broadcast %181 : vector<16x1xf32> to vector<16x32xf32>
    %190 = arith.subf %175, %189 : vector<16x32xf32>
    %cst_47 = arith.constant 9.99999974E-6 : f32
    %191 = vector.broadcast %cst_47 : f32 to vector<16x1xf32>
    %192 = arith.addf %188, %191 : vector<16x1xf32>
    %193 = math.rsqrt %192 : vector<16x1xf32>
    %194 = vector.broadcast %193 : vector<16x1xf32> to vector<16x32xf32>
    %195 = arith.mulf %190, %194 : vector<16x32xf32>
    %196 = vector.broadcast %176 : vector<1x32xf32> to vector<16x32xf32>
    %197 = arith.mulf %195, %196 : vector<16x32xf32>
    %198 = vector.broadcast %177 : vector<1x32xf32> to vector<16x32xf32>
    %199 = arith.addf %197, %198 : vector<16x32xf32>
    %c1 = arith.constant 1 : index
    %c0_48 = arith.constant 0 : index
    %c0_49 = arith.constant 0 : index
    %200 = vector.load %arg3[%c1, %c0_48, %c0_49] : memref<2x32x384xbf16, #tpu.memory_space<vmem>>, vector<1x32x384xbf16>
    %201 = vector.shape_cast %200 : vector<1x32x384xbf16> to vector<32x384xbf16>
    %c1_50 = arith.constant 1 : index
    %c0_51 = arith.constant 0 : index
    %c0_52 = arith.constant 0 : index
    %202 = vector.load %arg5[%c1_50, %c0_51, %c0_52] : memref<2x16x128xf32, #tpu.memory_space<vmem>>, vector<1x16x128xf32>
    %203 = vector.shape_cast %202 : vector<1x16x128xf32> to vector<16x128xf32>
    %204 = vector.extract_strided_slice %201 {offsets = [0, 0], sizes = [32, 96], strides = [1, 1]} : vector<32x384xbf16> to vector<32x96xbf16>
    %205 = vector.extract_strided_slice %203 {offsets = [0, 0], sizes = [1, 96], strides = [1, 1]} : vector<16x128xf32> to vector<1x96xf32>
    %206 = arith.truncf %199 : vector<16x32xf32> to vector<16x32xbf16>
    %cst_53 = arith.constant dense<0.000000e+00> : vector<16x96xf32>
    %207 = tpu.matmul %206, %204, %cst_53 {dimension_numbers = #tpu.dot_dimension_numbers<[1], [0], [0], [1], [0, 0, 1, 1], [], []>} : vector<16x32xbf16>, vector<32x96xbf16>, vector<16x96xf32> -> vector<16x96xf32>
    %208 = vector.broadcast %205 : vector<1x96xf32> to vector<16x96xf32>
    %209 = arith.addf %207, %208 : vector<16x96xf32>
    %210 = vector.extract_strided_slice %209 {offsets = [0, 0], sizes = [16, 32], strides = [1, 1]} : vector<16x96xf32> to vector<16x32xf32>
    %211 = vector.extract_strided_slice %209 {offsets = [0, 32], sizes = [16, 32], strides = [1, 1]} : vector<16x96xf32> to vector<16x32xf32>
    %212 = vector.extract_strided_slice %209 {offsets = [0, 64], sizes = [16, 32], strides = [1, 1]} : vector<16x96xf32> to vector<16x32xf32>
    %213 = arith.truncf %11 : vector<32x32xf32> to vector<32x32xbf16>
    %214 = arith.truncf %210 : vector<16x32xf32> to vector<16x32xbf16>
    %215 = vector.shape_cast %214 : vector<16x32xbf16> to vector<2x8x32xbf16>
    %216 = arith.truncf %211 : vector<16x32xf32> to vector<16x32xbf16>
    %217 = vector.shape_cast %216 : vector<16x32xbf16> to vector<2x8x32xbf16>
    %218 = arith.truncf %212 : vector<16x32xf32> to vector<16x32xbf16>
    %219 = vector.shape_cast %218 : vector<16x32xbf16> to vector<2x8x32xbf16>
    %220 = tpu.concatenate %217, %217, %217, %217 in 1 : vector<2x8x32xbf16>, vector<2x8x32xbf16>, vector<2x8x32xbf16>, vector<2x8x32xbf16> -> vector<2x32x32xbf16>
    %221 = vector.shape_cast %213 : vector<32x32xbf16> to vector<1x32x32xbf16>
    %222 = vector.broadcast %221 : vector<1x32x32xbf16> to vector<2x32x32xbf16>
    %223 = arith.mulf %220, %222 : vector<2x32x32xbf16>
    %224 = tpu.concatenate %219, %219, %219, %219 in 1 : vector<2x8x32xbf16>, vector<2x8x32xbf16>, vector<2x8x32xbf16>, vector<2x8x32xbf16> -> vector<2x32x32xbf16>
    %225 = vector.shape_cast %213 : vector<32x32xbf16> to vector<1x32x32xbf16>
    %226 = vector.broadcast %225 : vector<1x32x32xbf16> to vector<2x32x32xbf16>
    %227 = arith.mulf %224, %226 : vector<2x32x32xbf16>
    "tpu.trace_start"() <{level = 10 : i32, message = "bqd,bkd->bqk"}> : () -> ()
    %cst_54 = arith.constant dense<0.000000e+00> : vector<2x8x32xf32>
    %228 = tpu.matmul %215, %223, %cst_54 {dimension_numbers = #tpu.dot_dimension_numbers<[2], [2], [1], [1], [0, 0, 0, 1, 1, 1], [0], [0]>} : vector<2x8x32xbf16>, vector<2x32x32xbf16>, vector<2x8x32xf32> -> vector<2x8x32xf32>
    "tpu.trace_stop"() : () -> ()
    %229 = vector.shape_cast %228 : vector<2x8x32xf32> to vector<16x32xf32>
    %cst_55 = arith.constant dense<0xFF800000> : vector<16xf32>
    %230 = vector.multi_reduction <maximumf>, %229, %cst_55 [1] : vector<16x32xf32> to vector<16xf32>
    %231 = vector.shape_cast %230 : vector<16xf32> to vector<16x1xf32>
    %232 = vector.broadcast %231 : vector<16x1xf32> to vector<16x32xf32>
    %233 = arith.subf %229, %232 : vector<16x32xf32>
    %234 = math.exp %233 : vector<16x32xf32>
    %cst_56 = arith.constant dense<0.000000e+00> : vector<16x32xf32>
    %235 = tpu.matmul %234, %11, %cst_56 {dimension_numbers = #tpu.dot_dimension_numbers<[1], [0], [0], [1], [0, 0, 1, 1], [], []>} : vector<16x32xf32>, vector<32x32xf32>, vector<16x32xf32> -> vector<16x32xf32>
    %236 = arith.truncf %234 : vector<16x32xf32> to vector<16x32xbf16>
    %237 = vector.shape_cast %236 : vector<16x32xbf16> to vector<2x8x32xbf16>
    "tpu.trace_start"() <{level = 10 : i32, message = "bqk,bkd->bqd"}> : () -> ()
    %cst_57 = arith.constant dense<0.000000e+00> : vector<2x8x32xf32>
    %238 = tpu.matmul %237, %227, %cst_57 {dimension_numbers = #tpu.dot_dimension_numbers<[2], [1], [1], [2], [0, 0, 0, 1, 1, 2], [0], [0]>} : vector<2x8x32xbf16>, vector<2x32x32xbf16>, vector<2x8x32xf32> -> vector<2x8x32xf32>
    "tpu.trace_stop"() : () -> ()
    %239 = vector.shape_cast %238 : vector<2x8x32xf32> to vector<16x32xf32>
    %240 = tpu.reciprocal %235 {approx = true} : vector<16x32xf32> -> vector<16x32xf32>
    %241 = arith.mulf %239, %240 : vector<16x32xf32>
    %242 = vector.extract_strided_slice %201 {offsets = [0, 96], sizes = [32, 32], strides = [1, 1]} : vector<32x384xbf16> to vector<32x32xbf16>
    %243 = vector.extract_strided_slice %203 {offsets = [1, 0], sizes = [1, 32], strides = [1, 1]} : vector<16x128xf32> to vector<1x32xf32>
    %244 = arith.truncf %241 : vector<16x32xf32> to vector<16x32xbf16>
    %cst_58 = arith.constant dense<0.000000e+00> : vector<16x32xf32>
    %245 = tpu.matmul %244, %242, %cst_58 {dimension_numbers = #tpu.dot_dimension_numbers<[1], [0], [0], [1], [0, 0, 1, 1], [], []>} : vector<16x32xbf16>, vector<32x32xbf16>, vector<16x32xf32> -> vector<16x32xf32>
    %246 = vector.broadcast %243 : vector<1x32xf32> to vector<16x32xf32>
    %247 = arith.addf %245, %246 : vector<16x32xf32>
    %248 = arith.addf %199, %247 : vector<16x32xf32>
    %249 = vector.extract_strided_slice %203 {offsets = [2, 0], sizes = [1, 32], strides = [1, 1]} : vector<16x128xf32> to vector<1x32xf32>
    %250 = vector.extract_strided_slice %203 {offsets = [3, 0], sizes = [1, 32], strides = [1, 1]} : vector<16x128xf32> to vector<1x32xf32>
    %cst_59 = arith.constant dense<0.000000e+00> : vector<16xf32>
    %251 = vector.multi_reduction <add>, %248, %cst_59 [1] : vector<16x32xf32> to vector<16xf32>
    %252 = vector.shape_cast %251 : vector<16xf32> to vector<16x1xf32>
    %cst_60 = arith.constant 3.200000e+01 : f32
    %253 = vector.broadcast %cst_60 : f32 to vector<16x1xf32>
    %254 = arith.divf %252, %253 : vector<16x1xf32>
    %255 = vector.broadcast %254 : vector<16x1xf32> to vector<16x32xf32>
    %256 = arith.subf %248, %255 : vector<16x32xf32>
    %257 = arith.mulf %256, %256 : vector<16x32xf32>
    %cst_61 = arith.constant dense<0.000000e+00> : vector<16xf32>
    %258 = vector.multi_reduction <add>, %257, %cst_61 [1] : vector<16x32xf32> to vector<16xf32>
    %259 = vector.shape_cast %258 : vector<16xf32> to vector<16x1xf32>
    %cst_62 = arith.constant 3.200000e+01 : f32
    %260 = vector.broadcast %cst_62 : f32 to vector<16x1xf32>
    %261 = arith.divf %259, %260 : vector<16x1xf32>
    %262 = vector.broadcast %254 : vector<16x1xf32> to vector<16x32xf32>
    %263 = arith.subf %248, %262 : vector<16x32xf32>
    %cst_63 = arith.constant 9.99999974E-6 : f32
    %264 = vector.broadcast %cst_63 : f32 to vector<16x1xf32>
    %265 = arith.addf %261, %264 : vector<16x1xf32>
    %266 = math.rsqrt %265 : vector<16x1xf32>
    %267 = vector.broadcast %266 : vector<16x1xf32> to vector<16x32xf32>
    %268 = arith.mulf %263, %267 : vector<16x32xf32>
    %269 = vector.broadcast %249 : vector<1x32xf32> to vector<16x32xf32>
    %270 = arith.mulf %268, %269 : vector<16x32xf32>
    %271 = vector.broadcast %250 : vector<1x32xf32> to vector<16x32xf32>
    %272 = arith.addf %270, %271 : vector<16x32xf32>
    %273 = vector.extract_strided_slice %201 {offsets = [0, 128], sizes = [32, 32], strides = [1, 1]} : vector<32x384xbf16> to vector<32x32xbf16>
    %274 = vector.extract_strided_slice %203 {offsets = [4, 0], sizes = [1, 32], strides = [1, 1]} : vector<16x128xf32> to vector<1x32xf32>
    %275 = arith.truncf %272 : vector<16x32xf32> to vector<16x32xbf16>
    %cst_64 = arith.constant dense<0.000000e+00> : vector<16x32xf32>
    %276 = tpu.matmul %275, %273, %cst_64 {dimension_numbers = #tpu.dot_dimension_numbers<[1], [0], [0], [1], [0, 0, 1, 1], [], []>} : vector<16x32xbf16>, vector<32x32xbf16>, vector<16x32xf32> -> vector<16x32xf32>
    %277 = vector.broadcast %274 : vector<1x32xf32> to vector<16x32xf32>
    %278 = arith.addf %276, %277 : vector<16x32xf32>
    %279 = vector.extract_strided_slice %201 {offsets = [0, 160], sizes = [32, 64], strides = [1, 1]} : vector<32x384xbf16> to vector<32x64xbf16>
    %280 = vector.extract_strided_slice %203 {offsets = [5, 0], sizes = [1, 64], strides = [1, 1]} : vector<16x128xf32> to vector<1x64xf32>
    %281 = arith.truncf %10 : vector<8x32xf32> to vector<8x32xbf16>
    %cst_65 = arith.constant dense<0.000000e+00> : vector<8x64xf32>
    %282 = tpu.matmul %281, %279, %cst_65 {dimension_numbers = #tpu.dot_dimension_numbers<[1], [0], [0], [1], [0, 0, 1, 1], [], []>} : vector<8x32xbf16>, vector<32x64xbf16>, vector<8x64xf32> -> vector<8x64xf32>
    %283 = vector.broadcast %280 : vector<1x64xf32> to vector<8x64xf32>
    %284 = arith.addf %282, %283 : vector<8x64xf32>
    %285 = vector.extract_strided_slice %284 {offsets = [0, 0], sizes = [8, 32], strides = [1, 1]} : vector<8x64xf32> to vector<8x32xf32>
    %286 = vector.extract_strided_slice %284 {offsets = [0, 32], sizes = [8, 32], strides = [1, 1]} : vector<8x64xf32> to vector<8x32xf32>
    %287 = arith.truncf %12 : vector<16x32xf32> to vector<16x32xbf16>
    %288 = arith.truncf %278 : vector<16x32xf32> to vector<16x32xbf16>
    %289 = vector.shape_cast %288 : vector<16x32xbf16> to vector<2x8x32xbf16>
    %290 = arith.truncf %285 : vector<8x32xf32> to vector<8x32xbf16>
    %291 = vector.shape_cast %290 : vector<8x32xbf16> to vector<2x4x32xbf16>
    %292 = arith.truncf %286 : vector<8x32xf32> to vector<8x32xbf16>
    %293 = vector.shape_cast %292 : vector<8x32xbf16> to vector<2x4x32xbf16>
    %294 = tpu.concatenate %291, %291, %291, %291 in 1 : vector<2x4x32xbf16>, vector<2x4x32xbf16>, vector<2x4x32xbf16>, vector<2x4x32xbf16> -> vector<2x16x32xbf16>
    %295 = vector.shape_cast %287 : vector<16x32xbf16> to vector<1x16x32xbf16>
    %296 = vector.broadcast %295 : vector<1x16x32xbf16> to vector<2x16x32xbf16>
    %297 = arith.mulf %294, %296 : vector<2x16x32xbf16>
    %298 = tpu.concatenate %293, %293, %293, %293 in 1 : vector<2x4x32xbf16>, vector<2x4x32xbf16>, vector<2x4x32xbf16>, vector<2x4x32xbf16> -> vector<2x16x32xbf16>
    %299 = vector.shape_cast %287 : vector<16x32xbf16> to vector<1x16x32xbf16>
    %300 = vector.broadcast %299 : vector<1x16x32xbf16> to vector<2x16x32xbf16>
    %301 = arith.mulf %298, %300 : vector<2x16x32xbf16>
    "tpu.trace_start"() <{level = 10 : i32, message = "bqd,bkd->bqk"}> : () -> ()
    %cst_66 = arith.constant dense<0.000000e+00> : vector<2x8x16xf32>
    %302 = tpu.matmul %289, %297, %cst_66 {dimension_numbers = #tpu.dot_dimension_numbers<[2], [2], [1], [1], [0, 0, 0, 1, 1, 1], [0], [0]>} : vector<2x8x32xbf16>, vector<2x16x32xbf16>, vector<2x8x16xf32> -> vector<2x8x16xf32>
    "tpu.trace_stop"() : () -> ()
    %303 = vector.shape_cast %302 : vector<2x8x16xf32> to vector<16x16xf32>
    %cst_67 = arith.constant dense<0xFF800000> : vector<16xf32>
    %304 = vector.multi_reduction <maximumf>, %303, %cst_67 [1] : vector<16x16xf32> to vector<16xf32>
    %305 = vector.shape_cast %304 : vector<16xf32> to vector<16x1xf32>
    %306 = vector.broadcast %305 : vector<16x1xf32> to vector<16x16xf32>
    %307 = arith.subf %303, %306 : vector<16x16xf32>
    %308 = math.exp %307 : vector<16x16xf32>
    %cst_68 = arith.constant dense<0.000000e+00> : vector<16x32xf32>
    %309 = tpu.matmul %308, %12, %cst_68 {dimension_numbers = #tpu.dot_dimension_numbers<[1], [0], [0], [1], [0, 0, 1, 1], [], []>} : vector<16x16xf32>, vector<16x32xf32>, vector<16x32xf32> -> vector<16x32xf32>
    %310 = arith.truncf %308 : vector<16x16xf32> to vector<16x16xbf16>
    %311 = vector.shape_cast %310 : vector<16x16xbf16> to vector<2x8x16xbf16>
    "tpu.trace_start"() <{level = 10 : i32, message = "bqk,bkd->bqd"}> : () -> ()
    %cst_69 = arith.constant dense<0.000000e+00> : vector<2x8x32xf32>
    %312 = tpu.matmul %311, %301, %cst_69 {dimension_numbers = #tpu.dot_dimension_numbers<[2], [1], [1], [2], [0, 0, 0, 1, 1, 2], [0], [0]>} : vector<2x8x16xbf16>, vector<2x16x32xbf16>, vector<2x8x32xf32> -> vector<2x8x32xf32>
    "tpu.trace_stop"() : () -> ()
    %313 = vector.shape_cast %312 : vector<2x8x32xf32> to vector<16x32xf32>
    %314 = tpu.reciprocal %309 {approx = true} : vector<16x32xf32> -> vector<16x32xf32>
    %315 = arith.mulf %313, %314 : vector<16x32xf32>
    %316 = vector.extract_strided_slice %201 {offsets = [0, 224], sizes = [32, 32], strides = [1, 1]} : vector<32x384xbf16> to vector<32x32xbf16>
    %317 = vector.extract_strided_slice %203 {offsets = [6, 0], sizes = [1, 32], strides = [1, 1]} : vector<16x128xf32> to vector<1x32xf32>
    %318 = arith.truncf %315 : vector<16x32xf32> to vector<16x32xbf16>
    %cst_70 = arith.constant dense<0.000000e+00> : vector<16x32xf32>
    %319 = tpu.matmul %318, %316, %cst_70 {dimension_numbers = #tpu.dot_dimension_numbers<[1], [0], [0], [1], [0, 0, 1, 1], [], []>} : vector<16x32xbf16>, vector<32x32xbf16>, vector<16x32xf32> -> vector<16x32xf32>
    %320 = vector.broadcast %317 : vector<1x32xf32> to vector<16x32xf32>
    %321 = arith.addf %319, %320 : vector<16x32xf32>
    %322 = arith.addf %272, %321 : vector<16x32xf32>
    %323 = vector.extract_strided_slice %203 {offsets = [7, 0], sizes = [1, 32], strides = [1, 1]} : vector<16x128xf32> to vector<1x32xf32>
    %324 = vector.extract_strided_slice %203 {offsets = [8, 0], sizes = [1, 32], strides = [1, 1]} : vector<16x128xf32> to vector<1x32xf32>
    %cst_71 = arith.constant dense<0.000000e+00> : vector<16xf32>
    %325 = vector.multi_reduction <add>, %322, %cst_71 [1] : vector<16x32xf32> to vector<16xf32>
    %326 = vector.shape_cast %325 : vector<16xf32> to vector<16x1xf32>
    %cst_72 = arith.constant 3.200000e+01 : f32
    %327 = vector.broadcast %cst_72 : f32 to vector<16x1xf32>
    %328 = arith.divf %326, %327 : vector<16x1xf32>
    %329 = vector.broadcast %328 : vector<16x1xf32> to vector<16x32xf32>
    %330 = arith.subf %322, %329 : vector<16x32xf32>
    %331 = arith.mulf %330, %330 : vector<16x32xf32>
    %cst_73 = arith.constant dense<0.000000e+00> : vector<16xf32>
    %332 = vector.multi_reduction <add>, %331, %cst_73 [1] : vector<16x32xf32> to vector<16xf32>
    %333 = vector.shape_cast %332 : vector<16xf32> to vector<16x1xf32>
    %cst_74 = arith.constant 3.200000e+01 : f32
    %334 = vector.broadcast %cst_74 : f32 to vector<16x1xf32>
    %335 = arith.divf %333, %334 : vector<16x1xf32>
    %336 = vector.broadcast %328 : vector<16x1xf32> to vector<16x32xf32>
    %337 = arith.subf %322, %336 : vector<16x32xf32>
    %cst_75 = arith.constant 9.99999974E-6 : f32
    %338 = vector.broadcast %cst_75 : f32 to vector<16x1xf32>
    %339 = arith.addf %335, %338 : vector<16x1xf32>
    %340 = math.rsqrt %339 : vector<16x1xf32>
    %341 = vector.broadcast %340 : vector<16x1xf32> to vector<16x32xf32>
    %342 = arith.mulf %337, %341 : vector<16x32xf32>
    %343 = vector.broadcast %323 : vector<1x32xf32> to vector<16x32xf32>
    %344 = arith.mulf %342, %343 : vector<16x32xf32>
    %345 = vector.broadcast %324 : vector<1x32xf32> to vector<16x32xf32>
    %346 = arith.addf %344, %345 : vector<16x32xf32>
    %347 = vector.extract_strided_slice %201 {offsets = [0, 256], sizes = [32, 64], strides = [1, 1]} : vector<32x384xbf16> to vector<32x64xbf16>
    %348 = vector.extract_strided_slice %203 {offsets = [9, 0], sizes = [1, 64], strides = [1, 1]} : vector<16x128xf32> to vector<1x64xf32>
    %349 = arith.truncf %346 : vector<16x32xf32> to vector<16x32xbf16>
    %cst_76 = arith.constant dense<0.000000e+00> : vector<16x64xf32>
    %350 = tpu.matmul %349, %347, %cst_76 {dimension_numbers = #tpu.dot_dimension_numbers<[1], [0], [0], [1], [0, 0, 1, 1], [], []>} : vector<16x32xbf16>, vector<32x64xbf16>, vector<16x64xf32> -> vector<16x64xf32>
    %351 = vector.broadcast %348 : vector<1x64xf32> to vector<16x64xf32>
    %352 = arith.addf %350, %351 : vector<16x64xf32>
    %cst_77 = arith.constant 0.000000e+00 : f32
    %353 = vector.broadcast %cst_77 : f32 to vector<16x64xf32>
    %354 = arith.maximumf %352, %353 : vector<16x64xf32>
    %c1_78 = arith.constant 1 : index
    %c0_79 = arith.constant 0 : index
    %c0_80 = arith.constant 0 : index
    %355 = vector.load %arg4[%c1_78, %c0_79, %c0_80] : memref<2x64x32xbf16, #tpu.memory_space<vmem>>, vector<1x64x32xbf16>
    %356 = vector.shape_cast %355 : vector<1x64x32xbf16> to vector<64x32xbf16>
    %357 = vector.extract_strided_slice %203 {offsets = [10, 0], sizes = [1, 32], strides = [1, 1]} : vector<16x128xf32> to vector<1x32xf32>
    %358 = arith.truncf %354 : vector<16x64xf32> to vector<16x64xbf16>
    %cst_81 = arith.constant dense<0.000000e+00> : vector<16x32xf32>
    %359 = tpu.matmul %358, %356, %cst_81 {dimension_numbers = #tpu.dot_dimension_numbers<[1], [0], [0], [1], [0, 0, 1, 1], [], []>} : vector<16x64xbf16>, vector<64x32xbf16>, vector<16x32xf32> -> vector<16x32xf32>
    %360 = vector.broadcast %357 : vector<1x32xf32> to vector<16x32xf32>
    %361 = arith.addf %359, %360 : vector<16x32xf32>
    %362 = arith.addf %346, %361 : vector<16x32xf32>
    %363 = vector.extract_strided_slice %203 {offsets = [11, 0], sizes = [1, 32], strides = [1, 1]} : vector<16x128xf32> to vector<1x32xf32>
    %364 = vector.extract_strided_slice %203 {offsets = [12, 0], sizes = [1, 32], strides = [1, 1]} : vector<16x128xf32> to vector<1x32xf32>
    %cst_82 = arith.constant dense<0.000000e+00> : vector<16xf32>
    %365 = vector.multi_reduction <add>, %362, %cst_82 [1] : vector<16x32xf32> to vector<16xf32>
    %366 = vector.shape_cast %365 : vector<16xf32> to vector<16x1xf32>
    %cst_83 = arith.constant 3.200000e+01 : f32
    %367 = vector.broadcast %cst_83 : f32 to vector<16x1xf32>
    %368 = arith.divf %366, %367 : vector<16x1xf32>
    %369 = vector.broadcast %368 : vector<16x1xf32> to vector<16x32xf32>
    %370 = arith.subf %362, %369 : vector<16x32xf32>
    %371 = arith.mulf %370, %370 : vector<16x32xf32>
    %cst_84 = arith.constant dense<0.000000e+00> : vector<16xf32>
    %372 = vector.multi_reduction <add>, %371, %cst_84 [1] : vector<16x32xf32> to vector<16xf32>
    %373 = vector.shape_cast %372 : vector<16xf32> to vector<16x1xf32>
    %cst_85 = arith.constant 3.200000e+01 : f32
    %374 = vector.broadcast %cst_85 : f32 to vector<16x1xf32>
    %375 = arith.divf %373, %374 : vector<16x1xf32>
    %376 = vector.broadcast %368 : vector<16x1xf32> to vector<16x32xf32>
    %377 = arith.subf %362, %376 : vector<16x32xf32>
    %cst_86 = arith.constant 9.99999974E-6 : f32
    %378 = vector.broadcast %cst_86 : f32 to vector<16x1xf32>
    %379 = arith.addf %375, %378 : vector<16x1xf32>
    %380 = math.rsqrt %379 : vector<16x1xf32>
    %381 = vector.broadcast %380 : vector<16x1xf32> to vector<16x32xf32>
    %382 = arith.mulf %377, %381 : vector<16x32xf32>
    %383 = vector.broadcast %363 : vector<1x32xf32> to vector<16x32xf32>
    %384 = arith.mulf %382, %383 : vector<16x32xf32>
    %385 = vector.broadcast %364 : vector<1x32xf32> to vector<16x32xf32>
    %386 = arith.addf %384, %385 : vector<16x32xf32>
    %c0_87 = arith.constant 0 : index
    %c0_88 = arith.constant 0 : index
    %c0_89 = arith.constant 0 : index
    %387 = vector.load %arg3[%c0_87, %c0_88, %c0_89] : memref<2x32x384xbf16, #tpu.memory_space<vmem>>, vector<1x32x384xbf16>
    %388 = vector.shape_cast %387 : vector<1x32x384xbf16> to vector<32x384xbf16>
    %389 = vector.extract_strided_slice %388 {offsets = [0, 320], sizes = [32, 64], strides = [1, 1]} : vector<32x384xbf16> to vector<32x64xbf16>
    %c0_90 = arith.constant 0 : index
    %c0_91 = arith.constant 0 : index
    %c0_92 = arith.constant 0 : index
    %390 = vector.load %arg5[%c0_90, %c0_91, %c0_92] : memref<2x16x128xf32, #tpu.memory_space<vmem>>, vector<1x16x128xf32>
    %391 = vector.shape_cast %390 : vector<1x16x128xf32> to vector<16x128xf32>
    %392 = vector.extract_strided_slice %391 {offsets = [13, 0], sizes = [1, 64], strides = [1, 1]} : vector<16x128xf32> to vector<1x64xf32>
    %393 = arith.truncf %386 : vector<16x32xf32> to vector<16x32xbf16>
    %cst_93 = arith.constant dense<0.000000e+00> : vector<16x64xf32>
    %394 = tpu.matmul %393, %389, %cst_93 {dimension_numbers = #tpu.dot_dimension_numbers<[1], [0], [0], [1], [0, 0, 1, 1], [], []>} : vector<16x32xbf16>, vector<32x64xbf16>, vector<16x64xf32> -> vector<16x64xf32>
    %395 = vector.broadcast %392 : vector<1x64xf32> to vector<16x64xf32>
    %396 = arith.addf %394, %395 : vector<16x64xf32>
    %c0_94 = arith.constant 0 : index
    %c0_95 = arith.constant 0 : index
    %397 = vector.load %arg6[%c0_94, %c0_95] : memref<16x64xf32, #tpu.memory_space<vmem>>, vector<16x64xf32>
    tpu.vector_store %arg6[%c0_94, %c0_95], %396 {strides = array<i32>} : memref<16x64xf32, #tpu.memory_space<vmem>>, vector<16x64xf32>,
    return
  }
}

</mosaic_0001>

<llo_original>
// kernel: tpu_custom_call.1
$region0: #{tpu_custom_call.1}
  #allocation0 [shape = 'u32[]', space=smem, size = 0x4, offset = 0x4, fixed_abs, tag = 'smem constant byte address 0x4 - core index']
  #allocation1 [shape = 'u32[72,128]{1,0:T(1,128)}', space=vmem, size = 0x9000, scoped, tag = 'internal scratch']
  %s0 = inlined_call_operand.vmem [shape: s32[16,1], index: 0, kind: input, shape index: {}]
  %s1 = inlined_call_operand.vmem [shape: f32[8,32], index: 1, kind: input, shape index: {}]
  %s2 = inlined_call_operand.vmem [shape: f32[128,32], index: 2, kind: input, shape index: {}]
  %s3 = inlined_call_operand.vmem [shape: bf16[2,32,384], index: 3, kind: input, shape index: {}]
  %s4 = inlined_call_operand.vmem [shape: bf16[2,64,32], index: 4, kind: input, shape index: {}]
  %s5 = inlined_call_operand.vmem [shape: f32[2,16,128], index: 5, kind: input, shape index: {}]
  %s6 = inlined_call_operand.hbm [shape: f32[16,64], index: 6, kind: output, shape index: {}]
  %s7 = sld [smem:[#allocation0]]
  $region34: #{tpu_custom_call.1} parent=0
    _
  %s9 = ssub.s32 1, %s7
  %s10 = scalar_select 0, %s9, %s7
  $region1: #{tpu_custom_call.1} parent=0
    #allocation2 [shape = 'u8[8192]{0}', space=vmem, size = 0x2000, scoped, tag = 'output window, operand 0, single buffered']
    #allocation3 [shape = 's32[1]{0}', space=sflag, size = 0x4, scoped, tag = 'scoped memory for tpu_custom_call.1']
    %11 = vsyncpa [#allocation3], 0
    // Predicated region
    $region2: #{tpu_custom_call.1} parent=1 // pred_check
      _
    $region3: #{tpu_custom_call.1} parent=1 // pred_check_branch
      %13 = sbr.rel (0) target = $region5
    $region4: #{tpu_custom_call.1} parent=1 // pred_region
      _
    $region5: #{tpu_custom_call.1} parent=1 // pred_fallthru
      _
    // Predicated region
    $region6: #{tpu_custom_call.1} parent=1 // pred_check
      _
    $region7: #{tpu_custom_call.1} parent=1 // pred_check_branch
      %15 = sbr.rel (0) target = $region9
    $region8: #{tpu_custom_call.1} parent=1 // pred_region
      _
    $region9: #{tpu_custom_call.1} parent=1 // pred_fallthru
      _
    // Predicated region
    $region10: #{tpu_custom_call.1} parent=1 // pred_check
      _
    $region11: #{tpu_custom_call.1} parent=1 // pred_check_branch
      %17 = sbr.rel (0) target = $region13
    $region12: #{tpu_custom_call.1} parent=1 // pred_region
      _
    $region13: #{tpu_custom_call.1} parent=1 // pred_fallthru
      _
    // Predicated region
    $region14: #{tpu_custom_call.1} parent=1 // pred_check
      _
    $region15: #{tpu_custom_call.1} parent=1 // pred_check_branch
      %19 = sbr.rel (0) target = $region17
    $region16: #{tpu_custom_call.1} parent=1 // pred_region
      _
    $region17: #{tpu_custom_call.1} parent=1 // pred_fallthru
      _
    // Predicated region
    $region18: #{tpu_custom_call.1} parent=1 // pred_check
      _
    $region19: #{tpu_custom_call.1} parent=1 // pred_check_branch
      %21 = sbr.rel (0) target = $region21
    $region20: #{tpu_custom_call.1} parent=1 // pred_region
      _
    $region21: #{tpu_custom_call.1} parent=1 // pred_fallthru
      _
    // Predicated region
    $region22: #{tpu_custom_call.1} parent=1 // pred_check
      _
    $region23: #{tpu_custom_call.1} parent=1 // pred_check_branch
      %23 = sbr.rel (0) target = $region25
    $region24: #{tpu_custom_call.1} parent=1 // pred_region
      _
    $region25: #{tpu_custom_call.1} parent=1 // pred_fallthru
      _
    %v25 = vld [vmem:[%s0] sm:$0xff]
    %v26 = vld [vmem:[%s0 + $0x8] sm:$0xff]
    %v27 = vlaneseq
    %v28 = vand.u32 %v27, 127
    %29 = vset.pattern.permute.xlu0 0
    %30 = vperm.xlu0 %29, %v25
    %v31 = vpop.permute.xlu0 %30
    %32 = vset.pattern.permute.xlu0 0
    %33 = vperm.xlu0 %32, %v26
    %v34 = vpop.permute.xlu0 %33
    %vm35 = vcmp.eq.s32.totalorder %v28, %v31
    %vm36 = vcmp.eq.s32.totalorder %v28, %v34
    %v37 = vsel %vm35, 1, 0
    %v38 = vsel %vm36, 1, 0
    %v39 = vcvt.s32.f32 %v37
    %v40 = vcvt.s32.f32 %v38
    %v41 = vld [vmem:[%s2] sm:$0xff]
    %v42 = vld [vmem:[%s2 + $0x8] sm:$0xff]
    %v43 = vld [vmem:[%s2 + $0x10] sm:$0xff]
    %v44 = vld [vmem:[%s2 + $0x18] sm:$0xff]
    %v45 = vld [vmem:[%s2 + $0x20] sm:$0xff]
    %v46 = vld [vmem:[%s2 + $0x28] sm:$0xff]
    %v47 = vld [vmem:[%s2 + $0x30] sm:$0xff]
    %v48 = vld [vmem:[%s2 + $0x38] sm:$0xff]
    %v49 = vld [vmem:[%s2 + $0x40] sm:$0xff]
    %v50 = vld [vmem:[%s2 + $0x48] sm:$0xff]
    %vm51 = vcmask 523264
    %v53 = vsel %vm51, %v39, 0
    %v56 = vsel %vm51, %v40, 0
    %58 = vmatpush.msra.mxu0 0.0
    %59 = vmatpush.msra.mxu0 0.0
    %60 = vmatpush.msra.mxu0 0.0
    %61 = vmatpush.msra.mxu0 0.0
    %62 = vmatpush.msra.mxu0 0.0
    %63 = vmatpush.msra.mxu0 0.0
    %64 = vmatpush.msra.mxu0 0.0
    %65 = vmatpush.msra.mxu0 0.0
    %66 = vmatpush.msra.mxu0 %v48
    %67 = vmatpush.msra.mxu0 %v47
    %68 = vmatpush.msra.mxu0 %v46
    %69 = vmatpush.msra.mxu0 %v45
    %70 = vmatpush.msra.mxu0 %v44
    %71 = vmatpush.msra.mxu0 %v43
    %72 = vmatpush.msra.mxu0 %v42
    %73 = vmatpush.msra.mxu0 %v41
    %74 = vmatmul.f32.gmra.mxu0 %v53
    %v75 = vpop.f32.mrf.mxu0
    %v76 = vadd.f32 %v49, %v75
    %77 = vmatmul.f32.gmra.mxu0 %v56
    %v78 = vpop.f32.mrf.mxu0
    %v79 = vadd.f32 %v50, %v78
    %80 = vdwg.mxu0
    %v81 = vld [vmem:[%s1] sm:$0xff]
    %v82 = vld [vmem:[%s2 + $0x50] sm:$0xff]
    %v83 = vld [vmem:[%s2 + $0x58] sm:$0xff]
    %v84 = vld [vmem:[%s2 + $0x60] sm:$0xff]
    %v85 = vld [vmem:[%s2 + $0x68] sm:$0xff]
    %v86 = vld [vmem:[%s2 + $0x70] sm:$0xff]
    %v87 = vld [vmem:[%s2 + $0x78] sm:$0xff]
    %v88 = vld [vmem:[%s3] sm:$0xff]
    %v89 = vld [vmem:[%s3 + $0x8] sm:$0xf]
    %v90 = vld [vmem:[%s3 + $0xc] sm:$0xff]
    %v91 = vld [vmem:[%s3 + $0x14] sm:$0xf]
    %v92 = vld [vmem:[%s3 + $0x18] sm:$0xff]
    %v93 = vld [vmem:[%s3 + $0x20] sm:$0xf]
    %v94 = vld [vmem:[%s3 + $0x24] sm:$0xff]
    %v95 = vld [vmem:[%s3 + $0x2c] sm:$0xf]
    %v96 = vld [vmem:[%s5] sm:$0xff]
    %v97 = vld [vmem:[%s5 + $0x8] sm:$0xff]
    %v98 = vpack.c.bf16 %v79, %v76
    %v99 = vperm.slane %v96, 0
    %v104 = vunpack.c.l.b16 %v88
    %v105 = vunpack.c.l.b16 %v90
    %v106 = vunpack.c.l.b16 %v92
    %v107 = vunpack.c.l.b16 %v94
    %v108 = vpack.c.b16 %v105, %v104
    %v109 = vpack.c.b16 %v107, %v106
    %vm112 = vcmask 261120
    %v114 = vsel %vm112, %v98, 0
    %116 = vmatpush.bf16.msra.mxu0 0
    %117 = vmatpush.bf16.msra.mxu0 0
    %118 = vmatpush.bf16.msra.mxu0 0
    %119 = vmatpush.bf16.msra.mxu0 0
    %120 = vmatpush.bf16.msra.mxu0 0
    %121 = vmatpush.bf16.msra.mxu0 0
    %122 = vmatpush.bf16.msra.mxu0 %v109
    %123 = vmatpush.bf16.msra.mxu0 %v108
    %124 = vmatmul.bf16.gmra.mxu0 %v114
    %v125 = vpop.f32.mrf.mxu0
    %v126 = vadd.f32 %v99, %v125
    %v127 = vpop.f32.mrf.mxu0
    %v128 = vadd.f32 %v99, %v127
    %129 = vdwg.mxu0
    %v130 = vpack.c.bf16 %v82, %v82
    %v131 = vpack.c.bf16 %v83, %v83
    %v132 = vpack.c.bf16 %v84, %v84
    %v133 = vpack.c.bf16 %v85, %v85
    %v134 = vpack.c.bf16 %v126, %v126
    %v135 = vpack.c.bf16 %v128, %v128
    %v138 = vunpack.c.l.b16 %v134
    %v139 = vunpack.c.l.b16 %v135
    %v140 = vpack.c.b16 %v138, %v138
    %v141 = vpack.c.b16 %v139, %v139
    %vm142 = vcmask 1043456
    %v145 = vsel %vm142, %v134, %v140
    %v149 = vsel %vm142, %v135, %v141
    %v151 = vunpack.c.l.bf16 %v145
    %v152 = vunpack.c.h.bf16 %v145
    %v153 = vunpack.c.l.bf16 %v149
    %v154 = vunpack.c.h.bf16 %v149
    %v155 = vunpack.c.l.bf16 %v130
    %v156 = vunpack.c.l.bf16 %v131
    %v157 = vunpack.c.l.bf16 %v132
    %v158 = vunpack.c.l.bf16 %v133
    %163 = vrot.lane.b32.xlu0 %v155, 32
    %v164 = vpop.permute.xlu0 %163
    %165 = vrot.lane.b32.xlu0 %v156, 32
    %v166 = vpop.permute.xlu0 %165
    %167 = vrot.lane.b32.xlu0 %v157, 32
    %v168 = vpop.permute.xlu0 %167
    %169 = vrot.lane.b32.xlu0 %v158, 32
    %v170 = vpop.permute.xlu0 %169
    %v175 = vmul.f32 %v151, %v164
    %v176 = vmul.f32 %v152, %v166
    %v177 = vmul.f32 %v151, %v168
    %v178 = vmul.f32 %v152, %v170
    %v179 = vmul.f32 %v153, %v164
    %v180 = vmul.f32 %v154, %v166
    %v181 = vmul.f32 %v153, %v168
    %v182 = vmul.f32 %v154, %v170
    %v183 = vpack.c.bf16 %v175, %v175
    %v184 = vpack.c.bf16 %v176, %v176
    %v185 = vpack.c.bf16 %v177, %v177
    %v186 = vpack.c.bf16 %v178, %v178
    %v187 = vpack.c.bf16 %v179, %v179
    %v188 = vpack.c.bf16 %v180, %v180
    %v189 = vpack.c.bf16 %v181, %v181
    %v190 = vpack.c.bf16 %v182, %v182
    %191 = vrot.lane.b32.xlu0 %v155, 64
    %v192 = vpop.permute.xlu0 %191
    %193 = vrot.lane.b32.xlu0 %v156, 64
    %v194 = vpop.permute.xlu0 %193
    %195 = vrot.lane.b32.xlu0 %v157, 64
    %v196 = vpop.permute.xlu0 %195
    %197 = vrot.lane.b32.xlu0 %v158, 64
    %v198 = vpop.permute.xlu0 %197
    %v203 = vmul.f32 %v151, %v192
    %v204 = vmul.f32 %v152, %v194
    %v205 = vmul.f32 %v151, %v196
    %v206 = vmul.f32 %v152, %v198
    %v207 = vmul.f32 %v153, %v192
    %v208 = vmul.f32 %v154, %v194
    %v209 = vmul.f32 %v153, %v196
    %v210 = vmul.f32 %v154, %v198
    %v211 = vpack.c.bf16 %v203, %v203
    %v212 = vpack.c.bf16 %v204, %v204
    %v213 = vpack.c.bf16 %v205, %v205
    %v214 = vpack.c.bf16 %v206, %v206
    %v215 = vpack.c.bf16 %v207, %v207
    %v216 = vpack.c.bf16 %v208, %v208
    %v217 = vpack.c.bf16 %v209, %v209
    %v218 = vpack.c.bf16 %v210, %v210
    %v223 = vunpack.c.l.b16 %v183
    %v224 = vunpack.c.l.b16 %v184
    %v225 = vunpack.c.l.b16 %v185
    %v226 = vunpack.c.l.b16 %v186
    %v227 = vpack.c.b16 %v224, %v223
    %v228 = vpack.c.b16 %v226, %v225
    %229 = vrot.lane.b32.xlu0 %v227, 96
    %v230 = vpop.permute.xlu0 %229
    %231 = vrot.lane.b32.xlu0 %v228, 96
    %v232 = vpop.permute.xlu0 %231
    %v233 = vsel %vm112, %v134, 0
    %v236 = vsel %vm112, %v230, 0
    %v239 = vsel %vm112, %v232, 0
    %241 = vmatpush.bf16.xpose.msra.mxu0 0
    %242 = vmatpush.bf16.xpose.msra.mxu0 0
    %243 = vmatpush.bf16.xpose.msra.mxu0 0
    %244 = vmatpush.bf16.xpose.msra.mxu0 0
    %245 = vmatpush.bf16.xpose.msra.mxu0 0
    %246 = vmatpush.bf16.xpose.msra.mxu0 0
    %247 = vmatpush.bf16.xpose.msra.mxu0 %v239
    %248 = vmatpush.bf16.xpose.msra.mxu0 %v236
    %249 = vmatmul.bf16.gmra.mxu0 %v233
    %v250 = vpop.f32.mrf.mxu0
    %v251 = vadd.f32 0.0, %v250
    %v252 = vpop.f32.mrf.mxu0
    %253 = vdwg.mxu0
    %v258 = vunpack.c.l.b16 %v187
    %v259 = vunpack.c.l.b16 %v188
    %v260 = vunpack.c.l.b16 %v189
    %v261 = vunpack.c.l.b16 %v190
    %v262 = vpack.c.b16 %v259, %v258
    %v263 = vpack.c.b16 %v261, %v260
    %264 = vrot.lane.b32.xlu0 %v262, 96
    %v265 = vpop.permute.xlu0 %264
    %266 = vrot.lane.b32.xlu0 %v263, 96
    %v267 = vpop.permute.xlu0 %266
    %v268 = vsel %vm112, %v135, 0
    %v271 = vsel %vm112, %v265, 0
    %v274 = vsel %vm112, %v267, 0
    %276 = vmatpush.bf16.xpose.msra.mxu0 0
    %277 = vmatpush.bf16.xpose.msra.mxu0 0
    %278 = vmatpush.bf16.xpose.msra.mxu0 0
    %279 = vmatpush.bf16.xpose.msra.mxu0 0
    %280 = vmatpush.bf16.xpose.msra.mxu0 0
    %281 = vmatpush.bf16.xpose.msra.mxu0 0
    %282 = vmatpush.bf16.xpose.msra.mxu0 %v274
    %283 = vmatpush.bf16.xpose.msra.mxu0 %v271
    %284 = vmatmul.bf16.gmra.mxu0 %v268
    %v285 = vpop.f32.mrf.mxu0
    %v286 = vadd.f32 0.0, %v285
    %v287 = vpop.f32.mrf.mxu0
    %288 = vdwg.mxu0
    %v289 = vsel %vm112, %v251, -inf
    %290 = vmax.xlane.f32.xlu0 %v289
    %v291 = vpop.xlane.xlu0 %290
    %v292 = vsel %vm112, %v286, -inf
    %293 = vmax.xlane.f32.xlu0 %v292
    %v294 = vpop.xlane.xlu0 %293
    %v295 = vsub.f32 %v251, %v291
    %v296 = vsub.f32 %v286, %v294
    %v297 = vmul.f32 %v295, 1.442695
    %v298 = vpow.pop %v297
    %v299 = vmul.f32 %v296, 1.442695
    %v300 = vpow.pop %v299
    %v302 = vsel %vm112, %v298, 0
    %v305 = vsel %vm112, %v300, 0
    %307 = vmatpush.msra.mxu0 0.0
    %308 = vmatpush.msra.mxu0 0.0
    %309 = vmatpush.msra.mxu0 0.0
    %310 = vmatpush.msra.mxu0 0.0
    %311 = vmatpush.msra.mxu0 0.0
    %312 = vmatpush.msra.mxu0 0.0
    %313 = vmatpush.msra.mxu0 0.0
    %314 = vmatpush.msra.mxu0 0.0
    %315 = vmatpush.msra.mxu0 0.0
    %316 = vmatpush.msra.mxu0 0.0
    %317 = vmatpush.msra.mxu0 0.0
    %318 = vmatpush.msra.mxu0 0.0
    %319 = vmatpush.msra.mxu0 %v85
    %320 = vmatpush.msra.mxu0 %v84
    %321 = vmatpush.msra.mxu0 %v83
    %322 = vmatpush.msra.mxu0 %v82
    %323 = vmatmul.f32.gmra.mxu0 %v302
    %v324 = vpop.f32.mrf.mxu0
    %v325 = vadd.f32 0.0, %v324
    %326 = vmatmul.f32.gmra.mxu0 %v305
    %v327 = vpop.f32.mrf.mxu0
    %v328 = vadd.f32 0.0, %v327
    %329 = vdwg.mxu0
    %v330 = vpack.c.bf16 %v298, %v298
    %v331 = vpack.c.bf16 %v300, %v300
    %v336 = vunpack.c.l.b16 %v211
    %v337 = vunpack.c.l.b16 %v212
    %v338 = vunpack.c.l.b16 %v213
    %v339 = vunpack.c.l.b16 %v214
    %v340 = vpack.c.b16 %v337, %v336
    %v341 = vpack.c.b16 %v339, %v338
    %342 = vrot.lane.b32.xlu0 %v340, 64
    %v343 = vpop.permute.xlu0 %342
    %344 = vrot.lane.b32.xlu0 %v341, 64
    %v345 = vpop.permute.xlu0 %344
    %v349 = vsel %vm112, %v330, 0
    %351 = vmatpush.bf16.msra.mxu0 0
    %352 = vmatpush.bf16.msra.mxu0 0
    %353 = vmatpush.bf16.msra.mxu0 0
    %354 = vmatpush.bf16.msra.mxu0 0
    %355 = vmatpush.bf16.msra.mxu0 0
    %356 = vmatpush.bf16.msra.mxu0 0
    %357 = vmatpush.bf16.msra.mxu0 %v345
    %358 = vmatpush.bf16.msra.mxu0 %v343
    %359 = vmatmul.bf16.gmra.mxu0 %v349
    %v360 = vpop.f32.mrf.mxu0
    %v361 = vadd.f32 0.0, %v360
    %v362 = vpop.f32.mrf.mxu0
    %363 = vdwg.mxu0
    %v368 = vunpack.c.l.b16 %v215
    %v369 = vunpack.c.l.b16 %v216
    %v370 = vunpack.c.l.b16 %v217
    %v371 = vunpack.c.l.b16 %v218
    %v372 = vpack.c.b16 %v369, %v368
    %v373 = vpack.c.b16 %v371, %v370
    %374 = vrot.lane.b32.xlu0 %v372, 64
    %v375 = vpop.permute.xlu0 %374
    %376 = vrot.lane.b32.xlu0 %v373, 64
    %v377 = vpop.permute.xlu0 %376
    %v381 = vsel %vm112, %v331, 0
    %383 = vmatpush.bf16.msra.mxu0 0
    %384 = vmatpush.bf16.msra.mxu0 0
    %385 = vmatpush.bf16.msra.mxu0 0
    %386 = vmatpush.bf16.msra.mxu0 0
    %387 = vmatpush.bf16.msra.mxu0 0
    %388 = vmatpush.bf16.msra.mxu0 0
    %389 = vmatpush.bf16.msra.mxu0 %v377
    %390 = vmatpush.bf16.msra.mxu0 %v375
    %391 = vmatmul.bf16.gmra.mxu0 %v381
    %v392 = vpop.f32.mrf.mxu0
    %v393 = vadd.f32 0.0, %v392
    %v394 = vpop.f32.mrf.mxu0
    %395 = vdwg.mxu0
    %v396 = vrcp.pop %v325
    %v397 = vrcp.pop %v328
    %v398 = vmul.f32 %v361, %v396
    %v399 = vmul.f32 %v393, %v397
    %v400 = vpack.c.bf16 %v399, %v398
    %v401 = vperm.slane %v96, 1
    %402 = vrot.lane.b32.xlu0 %v108, 32
    %v403 = vpop.permute.xlu0 %402
    %404 = vrot.lane.b32.xlu0 %v109, 32
    %v405 = vpop.permute.xlu0 %404
    %v409 = vsel %vm112, %v400, 0
    %411 = vmatpush.bf16.msra.mxu0 0
    %412 = vmatpush.bf16.msra.mxu0 0
    %413 = vmatpush.bf16.msra.mxu0 0
    %414 = vmatpush.bf16.msra.mxu0 0
    %415 = vmatpush.bf16.msra.mxu0 0
    %416 = vmatpush.bf16.msra.mxu0 0
    %417 = vmatpush.bf16.msra.mxu0 %v405
    %418 = vmatpush.bf16.msra.mxu0 %v403
    %419 = vmatmul.bf16.gmra.mxu0 %v409
    %v420 = vpop.f32.mrf.mxu0
    %v421 = vadd.f32 %v401, %v420
    %v422 = vpop.f32.mrf.mxu0
    %v423 = vadd.f32 %v401, %v422
    %424 = vdwg.mxu0
    %v425 = vadd.f32 %v76, %v421
    %v426 = vadd.f32 %v79, %v423
    %v427 = vsel %vm112, %v425, 0.0
    %428 = vadd.xlane.f32.xlu0 %v427
    %v429 = vpop.xlane.xlu0 %428
    %v430 = vsel %vm112, %v426, 0.0
    %431 = vadd.xlane.f32.xlu0 %v430
    %v432 = vpop.xlane.xlu0 %431
    %v433 = vrcp.pop 32.0
    %v434 = vmul.f32 32.0, %v433
    %v435 = vsub.f32 1.0, %v434
    %v436 = vmul.f32 %v433, %v435
    %v437 = vadd.f32 %v433, %v436
    %vm438 = vweird.f32 %v433
    %v439 = vsel %vm438, %v433, %v437
    %v440 = vmul.f32 %v429, %v439
    %v441 = vmul.f32 %v432, %v439
    %v442 = vsub.f32 %v425, %v440
    %v443 = vsub.f32 %v426, %v441
    %v444 = vmul.f32 %v442, %v442
    %v445 = vmul.f32 %v443, %v443
    %v446 = vsel %vm112, %v444, 0.0
    %447 = vadd.xlane.f32.xlu0 %v446
    %v448 = vpop.xlane.xlu0 %447
    %v449 = vsel %vm112, %v445, 0.0
    %450 = vadd.xlane.f32.xlu0 %v449
    %v451 = vpop.xlane.xlu0 %450
    %v452 = vmul.f32 %v448, %v439
    %v453 = vmul.f32 %v451, %v439
    %v454 = vadd.f32 %v452, 1e-05
    %v455 = vadd.f32 %v453, 1e-05
    %v456 = vrsqrt.pop %v454
    %v457 = vmul.f32 %v456, %v454
    %v458 = vmul.f32 %v457, %v456
    %v459 = vmul.f32 0.5, %v458
    %v460 = vsub.f32 1.5, %v459
    %v461 = vmul.f32 %v456, %v460
    %vm462 = vweird.f32 %v454
    %vm463 = vweird.f32 %v456
    %vm464 = vmor %vm462, %vm463
    %v465 = vsel %vm464, %v456, %v461
    %v466 = vrsqrt.pop %v455
    %v467 = vmul.f32 %v466, %v455
    %v468 = vmul.f32 %v467, %v466
    %v469 = vmul.f32 0.5, %v468
    %v470 = vsub.f32 1.5, %v469
    %v471 = vmul.f32 %v466, %v470
    %vm472 = vweird.f32 %v455
    %vm473 = vweird.f32 %v466
    %vm474 = vmor %vm472, %vm473
    %v475 = vsel %vm474, %v466, %v471
    %v476 = vmul.f32 %v442, %v465
    %v477 = vmul.f32 %v443, %v475
    %v478 = vperm.slane %v96, 2
    %v479 = vmul.f32 %v476, %v478
    %v480 = vmul.f32 %v477, %v478
    %v481 = vperm.slane %v96, 3
    %v482 = vadd.f32 %v479, %v481
    %v483 = vadd.f32 %v480, %v481
    %v484 = vpack.c.bf16 %v483, %v482
    %v485 = vperm.slane %v96, 4
    %v486 = vunpack.c.h.b16 %v88
    %v487 = vunpack.c.h.b16 %v90
    %v488 = vunpack.c.h.b16 %v92
    %v489 = vunpack.c.h.b16 %v94
    %v490 = vpack.c.b16 %v487, %v486
    %v491 = vpack.c.b16 %v489, %v488
    %v495 = vsel %vm112, %v484, 0
    %497 = vmatpush.bf16.msra.mxu0 0
    %498 = vmatpush.bf16.msra.mxu0 0
    %499 = vmatpush.bf16.msra.mxu0 0
    %500 = vmatpush.bf16.msra.mxu0 0
    %501 = vmatpush.bf16.msra.mxu0 0
    %502 = vmatpush.bf16.msra.mxu0 0
    %503 = vmatpush.bf16.msra.mxu0 %v491
    %504 = vmatpush.bf16.msra.mxu0 %v490
    %505 = vmatmul.bf16.gmra.mxu0 %v495
    %v506 = vpop.f32.mrf.mxu0
    %v507 = vadd.f32 %v485, %v506
    %v508 = vpop.f32.mrf.mxu0
    %v509 = vadd.f32 %v485, %v508
    %510 = vdwg.mxu0
    %v511 = vpack.c.bf16 %v81, %v81
    %v512 = vperm.slane %v96, 5
    %513 = vrot.lane.b32.xlu0 %v490, 96
    %v514 = vpop.permute.xlu0 %513
    %515 = vrot.lane.b32.xlu0 %v491, 96
    %v516 = vpop.permute.xlu0 %515
    %v520 = vsel %vm112, %v511, 0
    %522 = vmatpush.bf16.msra.mxu0 0
    %523 = vmatpush.bf16.msra.mxu0 0
    %524 = vmatpush.bf16.msra.mxu0 0
    %525 = vmatpush.bf16.msra.mxu0 0
    %526 = vmatpush.bf16.msra.mxu0 0
    %527 = vmatpush.bf16.msra.mxu0 0
    %528 = vmatpush.bf16.msra.mxu0 %v516
    %529 = vmatpush.bf16.msra.mxu0 %v514
    %530 = vmatmul.bf16.gmra.mxu0 %v520
    %v531 = vpop.f32.mrf.mxu0
    %v532 = vadd.f32 %v512, %v531
    %v533 = vpop.f32.mrf.mxu0
    %534 = vdwg.mxu0
    %v535 = vpack.c.bf16 %v86, %v86
    %v536 = vpack.c.bf16 %v87, %v87
    %v537 = vpack.c.bf16 %v507, %v507
    %v538 = vpack.c.bf16 %v509, %v509
    %v539 = vpack.c.bf16 %v532, %v532
    %v541 = vrot.slane %v539, 2
    %vm542 = vcmask 1041408
    %v545 = vsel %vm542, %v539, %v541
    %vm546 = vcmask 1043458
    %v547 = vsel %vm546, %v539, %v541
    %v549 = vrot.slane %v547, 2
    %s550 = scalar_lea.vmem [#allocation1], 1
    %551 = vst [vmem:[%s550] ss:$4 sm:$0xff] %v545
    %v552 = vld.sshfl [vmem:[#allocation1] sm:$0xff pattern:$0x73625140]
    %s554 = scalar_lea.vmem [#allocation1], 33
    %555 = vst [vmem:[%s554] ss:$4 sm:$0xff] %v549
    %v556 = vld.sshfl [vmem:[#allocation1 + $0x20] sm:$0xff pattern:$0x73625140]
    %s557 = scalar_lea.vmem [#allocation1], 2
    %558 = vst [vmem:[%s557] ss:$4 sm:$0xff] %v545
    %v559 = vld.sshfl [vmem:[#allocation1] sm:$0xff pattern:$0x73625140]
    %s560 = scalar_lea.vmem [#allocation1], 34
    %561 = vst [vmem:[%s560] ss:$4 sm:$0xff] %v549
    %v562 = vld.sshfl [vmem:[#allocation1 + $0x20] sm:$0xff pattern:$0x73625140]
    %s563 = scalar_lea.vmem [#allocation1], 3
    %564 = vst [vmem:[%s563] ss:$4 sm:$0xff] %v545
    %v565 = vld.sshfl [vmem:[#allocation1] sm:$0xff pattern:$0x73625140]
    %s566 = scalar_lea.vmem [#allocation1], 35
    %567 = vst [vmem:[%s566] ss:$4 sm:$0xff] %v549
    %v568 = vld.sshfl [vmem:[#allocation1 + $0x20] sm:$0xff pattern:$0x73625140]
    %v569 = vsel %vm542, %v545, %v552
    %v570 = vsel %vm542, %v549, %v556
    %v571 = vsel %vm142, %v569, %v559
    %v572 = vsel %vm142, %v570, %v562
    %vm573 = vcmask 1045504
    %v574 = vsel %vm573, %v571, %v565
    %v576 = vsel %vm573, %v572, %v568
    %v578 = vunpack.c.l.bf16 %v574
    %v579 = vunpack.c.h.bf16 %v574
    %v580 = vunpack.c.l.bf16 %v576
    %v581 = vunpack.c.h.bf16 %v576
    %v582 = vunpack.c.l.bf16 %v535
    %v583 = vunpack.c.l.bf16 %v536
    %v584 = vmul.f32 %v578, %v582
    %v585 = vmul.f32 %v579, %v583
    %v586 = vmul.f32 %v580, %v582
    %v587 = vmul.f32 %v581, %v583
    %v588 = vpack.c.bf16 %v584, %v584
    %v589 = vpack.c.bf16 %v585, %v585
    %v590 = vpack.c.bf16 %v586, %v586
    %v591 = vpack.c.bf16 %v587, %v587
    %s592 = scalar_lea.vmem [#allocation1], 1
    %593 = vst [vmem:[%s592] ss:$4 sm:$0xff] %v545
    %v594 = vld.sshfl [vmem:[#allocation1] sm:$0xff pattern:$0x73625140]
    %s595 = scalar_lea.vmem [#allocation1], 33
    %596 = vst [vmem:[%s595] ss:$4 sm:$0xff] %v549
    %v597 = vld.sshfl [vmem:[#allocation1 + $0x20] sm:$0xff pattern:$0x73625140]
    %s598 = scalar_lea.vmem [#allocation1], 2
    %599 = vst [vmem:[%s598] ss:$4 sm:$0xff] %v545
    %v600 = vld.sshfl [vmem:[#allocation1] sm:$0xff pattern:$0x73625140]
    %s601 = scalar_lea.vmem [#allocation1], 34
    %602 = vst [vmem:[%s601] ss:$4 sm:$0xff] %v549
    %v603 = vld.sshfl [vmem:[#allocation1 + $0x20] sm:$0xff pattern:$0x73625140]
    %s604 = scalar_lea.vmem [#allocation1], 3
    %605 = vst [vmem:[%s604] ss:$4 sm:$0xff] %v545
    %v606 = vld.sshfl [vmem:[#allocation1] sm:$0xff pattern:$0x73625140]
    %s607 = scalar_lea.vmem [#allocation1], 35
    %608 = vst [vmem:[%s607] ss:$4 sm:$0xff] %v549
    %v609 = vld.sshfl [vmem:[#allocation1 + $0x20] sm:$0xff pattern:$0x73625140]
    %v610 = vsel %vm542, %v545, %v594
    %v611 = vsel %vm542, %v549, %v597
    %v612 = vsel %vm142, %v610, %v600
    %v613 = vsel %vm142, %v611, %v603
    %v614 = vsel %vm573, %v612, %v606
    %v616 = vsel %vm573, %v613, %v609
    %v618 = vunpack.c.l.bf16 %v614
    %v619 = vunpack.c.h.bf16 %v614
    %v620 = vunpack.c.l.bf16 %v616
    %v621 = vunpack.c.h.bf16 %v616
    %624 = vrot.lane.b32.xlu0 %v582, 32
    %v625 = vpop.permute.xlu0 %624
    %626 = vrot.lane.b32.xlu0 %v583, 32
    %v627 = vpop.permute.xlu0 %626
    %v630 = vmul.f32 %v618, %v625
    %v631 = vmul.f32 %v619, %v627
    %v632 = vmul.f32 %v620, %v625
    %v633 = vmul.f32 %v621, %v627
    %v634 = vpack.c.bf16 %v630, %v630
    %v635 = vpack.c.bf16 %v631, %v631
    %v636 = vpack.c.bf16 %v632, %v632
    %v637 = vpack.c.bf16 %v633, %v633
    %v640 = vunpack.c.l.b16 %v588
    %v641 = vunpack.c.l.b16 %v589
    %v642 = vpack.c.b16 %v641, %v640
    %v644 = vsel %vm112, %v537, 0
    %v647 = vsel %vm112, %v642, 0
    %649 = vmatpush.bf16.xpose.msra.mxu0 0
    %650 = vmatpush.bf16.xpose.msra.mxu0 0
    %651 = vmatpush.bf16.xpose.msra.mxu0 0
    %652 = vmatpush.bf16.xpose.msra.mxu0 0
    %653 = vmatpush.bf16.xpose.msra.mxu0 0
    %654 = vmatpush.bf16.xpose.msra.mxu0 0
    %655 = vmatpush.bf16.xpose.msra.mxu0 0
    %656 = vmatpush.bf16.xpose.msra.mxu0 %v647
    %657 = vmatmul.bf16.gmra.mxu0 %v644
    %v658 = vpop.f32.mrf.mxu0
    %v659 = vadd.f32 0.0, %v658
    %v660 = vpop.f32.mrf.mxu0
    %661 = vdwg.mxu0
    %v664 = vunpack.c.l.b16 %v590
    %v665 = vunpack.c.l.b16 %v591
    %v666 = vpack.c.b16 %v665, %v664
    %v668 = vsel %vm112, %v538, 0
    %v671 = vsel %vm112, %v666, 0
    %673 = vmatpush.bf16.xpose.msra.mxu0 0
    %674 = vmatpush.bf16.xpose.msra.mxu0 0
    %675 = vmatpush.bf16.xpose.msra.mxu0 0
    %676 = vmatpush.bf16.xpose.msra.mxu0 0
    %677 = vmatpush.bf16.xpose.msra.mxu0 0
    %678 = vmatpush.bf16.xpose.msra.mxu0 0
    %679 = vmatpush.bf16.xpose.msra.mxu0 0
    %680 = vmatpush.bf16.xpose.msra.mxu0 %v671
    %681 = vmatmul.bf16.gmra.mxu0 %v668
    %v682 = vpop.f32.mrf.mxu0
    %v683 = vadd.f32 0.0, %v682
    %v684 = vpop.f32.mrf.mxu0
    %685 = vdwg.mxu0
    %vm686 = vcmask 130048
    %v687 = vsel %vm686, %v659, -inf
    %688 = vmax.xlane.f32.xlu0 %v687
    %v689 = vpop.xlane.xlu0 %688
    %v690 = vsel %vm686, %v683, -inf
    %691 = vmax.xlane.f32.xlu0 %v690
    %v692 = vpop.xlane.xlu0 %691
    %v693 = vsub.f32 %v659, %v689
    %v694 = vsub.f32 %v683, %v692
    %v695 = vmul.f32 %v693, 1.442695
    %v696 = vpow.pop %v695
    %v697 = vmul.f32 %v694, 1.442695
    %v698 = vpow.pop %v697
    %v700 = vsel %vm686, %v696, 0
    %v703 = vsel %vm686, %v698, 0
    %705 = vmatpush.msra.mxu0 0.0
    %706 = vmatpush.msra.mxu0 0.0
    %707 = vmatpush.msra.mxu0 0.0
    %708 = vmatpush.msra.mxu0 0.0
    %709 = vmatpush.msra.mxu0 0.0
    %710 = vmatpush.msra.mxu0 0.0
    %711 = vmatpush.msra.mxu0 0.0
    %712 = vmatpush.msra.mxu0 0.0
    %713 = vmatpush.msra.mxu0 0.0
    %714 = vmatpush.msra.mxu0 0.0
    %715 = vmatpush.msra.mxu0 0.0
    %716 = vmatpush.msra.mxu0 0.0
    %717 = vmatpush.msra.mxu0 0.0
    %718 = vmatpush.msra.mxu0 0.0
    %719 = vmatpush.msra.mxu0 %v87
    %720 = vmatpush.msra.mxu0 %v86
    %721 = vmatmul.f32.gmra.mxu0 %v700
    %v722 = vpop.f32.mrf.mxu0
    %v723 = vadd.f32 0.0, %v722
    %724 = vmatmul.f32.gmra.mxu0 %v703
    %v725 = vpop.f32.mrf.mxu0
    %v726 = vadd.f32 0.0, %v725
    %727 = vdwg.mxu0
    %v728 = vpack.c.bf16 %v696, %v696
    %v729 = vpack.c.bf16 %v698, %v698
    %v732 = vunpack.c.l.b16 %v634
    %v733 = vunpack.c.l.b16 %v635
    %v734 = vpack.c.b16 %v733, %v732
    %735 = vrot.lane.b32.xlu0 %v734, 96
    %v736 = vpop.permute.xlu0 %735
    %v739 = vsel %vm686, %v728, 0
    %741 = vmatpush.bf16.msra.mxu0 0
    %742 = vmatpush.bf16.msra.mxu0 0
    %743 = vmatpush.bf16.msra.mxu0 0
    %744 = vmatpush.bf16.msra.mxu0 0
    %745 = vmatpush.bf16.msra.mxu0 0
    %746 = vmatpush.bf16.msra.mxu0 0
    %747 = vmatpush.bf16.msra.mxu0 0
    %748 = vmatpush.bf16.msra.mxu0 %v736
    %749 = vmatmul.bf16.gmra.mxu0 %v739
    %v750 = vpop.f32.mrf.mxu0
    %v751 = vadd.f32 0.0, %v750
    %v752 = vpop.f32.mrf.mxu0
    %753 = vdwg.mxu0
    %v756 = vunpack.c.l.b16 %v636
    %v757 = vunpack.c.l.b16 %v637
    %v758 = vpack.c.b16 %v757, %v756
    %759 = vrot.lane.b32.xlu0 %v758, 96
    %v760 = vpop.permute.xlu0 %759
    %v763 = vsel %vm686, %v729, 0
    %765 = vmatpush.bf16.msra.mxu0 0
    %766 = vmatpush.bf16.msra.mxu0 0
    %767 = vmatpush.bf16.msra.mxu0 0
    %768 = vmatpush.bf16.msra.mxu0 0
    %769 = vmatpush.bf16.msra.mxu0 0
    %770 = vmatpush.bf16.msra.mxu0 0
    %771 = vmatpush.bf16.msra.mxu0 0
    %772 = vmatpush.bf16.msra.mxu0 %v760
    %773 = vmatmul.bf16.gmra.mxu0 %v763
    %v774 = vpop.f32.mrf.mxu0
    %v775 = vadd.f32 0.0, %v774
    %v776 = vpop.f32.mrf.mxu0
    %777 = vdwg.mxu0
    %v778 = vrcp.pop %v723
    %v779 = vrcp.pop %v726
    %v780 = vmul.f32 %v751, %v778
    %v781 = vmul.f32 %v775, %v779
    %v782 = vpack.c.bf16 %v781, %v780
    %v783 = vperm.slane %v96, 6
    %784 = vrot.lane.b32.xlu0 %v490, 32
    %v785 = vpop.permute.xlu0 %784
    %786 = vrot.lane.b32.xlu0 %v491, 32
    %v787 = vpop.permute.xlu0 %786
    %v791 = vsel %vm112, %v782, 0
    %793 = vmatpush.bf16.msra.mxu0 0
    %794 = vmatpush.bf16.msra.mxu0 0
    %795 = vmatpush.bf16.msra.mxu0 0
    %796 = vmatpush.bf16.msra.mxu0 0
    %797 = vmatpush.bf16.msra.mxu0 0
    %798 = vmatpush.bf16.msra.mxu0 0
    %799 = vmatpush.bf16.msra.mxu0 %v787
    %800 = vmatpush.bf16.msra.mxu0 %v785
    %801 = vmatmul.bf16.gmra.mxu0 %v791
    %v802 = vpop.f32.mrf.mxu0
    %v803 = vadd.f32 %v783, %v802
    %v804 = vpop.f32.mrf.mxu0
    %v805 = vadd.f32 %v783, %v804
    %806 = vdwg.mxu0
    %v807 = vadd.f32 %v482, %v803
    %v808 = vadd.f32 %v483, %v805
    %v809 = vsel %vm112, %v807, 0.0
    %810 = vadd.xlane.f32.xlu0 %v809
    %v811 = vpop.xlane.xlu0 %810
    %v812 = vsel %vm112, %v808, 0.0
    %813 = vadd.xlane.f32.xlu0 %v812
    %v814 = vpop.xlane.xlu0 %813
    %v815 = vmul.f32 %v811, %v439
    %v816 = vmul.f32 %v814, %v439
    %v817 = vsub.f32 %v807, %v815
    %v818 = vsub.f32 %v808, %v816
    %v819 = vmul.f32 %v817, %v817
    %v820 = vmul.f32 %v818, %v818
    %v821 = vsel %vm112, %v819, 0.0
    %822 = vadd.xlane.f32.xlu0 %v821
    %v823 = vpop.xlane.xlu0 %822
    %v824 = vsel %vm112, %v820, 0.0
    %825 = vadd.xlane.f32.xlu0 %v824
    %v826 = vpop.xlane.xlu0 %825
    %v827 = vmul.f32 %v823, %v439
    %v828 = vmul.f32 %v826, %v439
    %v829 = vadd.f32 %v827, 1e-05
    %v830 = vadd.f32 %v828, 1e-05
    %v831 = vrsqrt.pop %v829
    %v832 = vmul.f32 %v831, %v829
    %v833 = vmul.f32 %v832, %v831
    %v834 = vmul.f32 0.5, %v833
    %v835 = vsub.f32 1.5, %v834
    %v836 = vmul.f32 %v831, %v835
    %vm837 = vweird.f32 %v829
    %vm838 = vweird.f32 %v831
    %vm839 = vmor %vm837, %vm838
    %v840 = vsel %vm839, %v831, %v836
    %v841 = vrsqrt.pop %v830
    %v842 = vmul.f32 %v841, %v830
    %v843 = vmul.f32 %v842, %v841
    %v844 = vmul.f32 0.5, %v843
    %v845 = vsub.f32 1.5, %v844
    %v846 = vmul.f32 %v841, %v845
    %vm847 = vweird.f32 %v830
    %vm848 = vweird.f32 %v841
    %vm849 = vmor %vm847, %vm848
    %v850 = vsel %vm849, %v841, %v846
    %v851 = vmul.f32 %v817, %v840
    %v852 = vmul.f32 %v818, %v850
    %v853 = vperm.slane %v96, 7
    %v854 = vmul.f32 %v851, %v853
    %v855 = vmul.f32 %v852, %v853
    %v856 = vperm.slane %v97, 0
    %v857 = vadd.f32 %v854, %v856
    %v858 = vadd.f32 %v855, %v856
    %v859 = vpack.c.bf16 %v858, %v857
    %v860 = vperm.slane %v97, 1
    %v865 = vunpack.c.l.b16 %v89
    %v866 = vunpack.c.l.b16 %v91
    %v867 = vunpack.c.l.b16 %v93
    %v868 = vunpack.c.l.b16 %v95
    %v869 = vpack.c.b16 %v866, %v865
    %v870 = vpack.c.b16 %v868, %v867
    %v874 = vsel %vm112, %v859, 0
    %876 = vmatpush.bf16.msra.mxu0 0
    %877 = vmatpush.bf16.msra.mxu0 0
    %878 = vmatpush.bf16.msra.mxu0 0
    %879 = vmatpush.bf16.msra.mxu0 0
    %880 = vmatpush.bf16.msra.mxu0 0
    %881 = vmatpush.bf16.msra.mxu0 0
    %882 = vmatpush.bf16.msra.mxu0 %v870
    %883 = vmatpush.bf16.msra.mxu0 %v869
    %884 = vmatmul.bf16.gmra.mxu0 %v874
    %v885 = vpop.f32.mrf.mxu0
    %v886 = vadd.f32 %v860, %v885
    %v887 = vpop.f32.mrf.mxu0
    %v888 = vadd.f32 %v860, %v887
    %889 = vdwg.mxu0
    %v890 = vmax.f32 %v886, 0.0
    %v891 = vmax.f32 %v888, 0.0
    %v892 = vld [vmem:[%s4] sm:$0xf]
    %v893 = vld [vmem:[%s4 + $0x4] sm:$0xf]
    %v894 = vld [vmem:[%s4 + $0x8] sm:$0xf]
    %v895 = vld [vmem:[%s4 + $0xc] sm:$0xf]
    %v896 = vld [vmem:[%s4 + $0x10] sm:$0xf]
    %v897 = vld [vmem:[%s4 + $0x14] sm:$0xf]
    %v898 = vld [vmem:[%s4 + $0x18] sm:$0xf]
    %v899 = vld [vmem:[%s4 + $0x1c] sm:$0xf]
    %v900 = vpack.c.bf16 %v891, %v890
    %v901 = vperm.slane %v97, 2
    %v910 = vunpack.c.l.b16 %v892
    %v911 = vunpack.c.l.b16 %v893
    %v912 = vunpack.c.l.b16 %v894
    %v913 = vunpack.c.l.b16 %v895
    %v914 = vunpack.c.l.b16 %v896
    %v915 = vunpack.c.l.b16 %v897
    %v916 = vunpack.c.l.b16 %v898
    %v917 = vunpack.c.l.b16 %v899
    %v918 = vpack.c.b16 %v911, %v910
    %v919 = vpack.c.b16 %v913, %v912
    %v920 = vpack.c.b16 %v915, %v914
    %v921 = vpack.c.b16 %v917, %v916
    %v927 = vsel %vm51, %v900, 0
    %929 = vmatpush.bf16.msra.mxu0 0
    %930 = vmatpush.bf16.msra.mxu0 0
    %931 = vmatpush.bf16.msra.mxu0 0
    %932 = vmatpush.bf16.msra.mxu0 0
    %933 = vmatpush.bf16.msra.mxu0 %v921
    %934 = vmatpush.bf16.msra.mxu0 %v920
    %935 = vmatpush.bf16.msra.mxu0 %v919
    %936 = vmatpush.bf16.msra.mxu0 %v918
    %937 = vmatmul.bf16.gmra.mxu0 %v927
    %v938 = vpop.f32.mrf.mxu0
    %v939 = vadd.f32 %v901, %v938
    %v940 = vpop.f32.mrf.mxu0
    %v941 = vadd.f32 %v901, %v940
    %942 = vdwg.mxu0
    %v943 = vadd.f32 %v857, %v939
    %v944 = vadd.f32 %v858, %v941
    %v945 = vsel %vm112, %v943, 0.0
    %946 = vadd.xlane.f32.xlu0 %v945
    %v947 = vpop.xlane.xlu0 %946
    %v948 = vsel %vm112, %v944, 0.0
    %949 = vadd.xlane.f32.xlu0 %v948
    %v950 = vpop.xlane.xlu0 %949
    %v951 = vmul.f32 %v947, %v439
    %v952 = vmul.f32 %v950, %v439
    %v953 = vsub.f32 %v943, %v951
    %v954 = vsub.f32 %v944, %v952
    %v955 = vmul.f32 %v953, %v953
    %v956 = vmul.f32 %v954, %v954
    %v957 = vsel %vm112, %v955, 0.0
    %958 = vadd.xlane.f32.xlu0 %v957
    %v959 = vpop.xlane.xlu0 %958
    %v960 = vsel %vm112, %v956, 0.0
    %961 = vadd.xlane.f32.xlu0 %v960
    %v962 = vpop.xlane.xlu0 %961
    %v963 = vmul.f32 %v959, %v439
    %v964 = vmul.f32 %v962, %v439
    %v965 = vadd.f32 %v963, 1e-05
    %v966 = vadd.f32 %v964, 1e-05
    %v967 = vrsqrt.pop %v965
    %v968 = vmul.f32 %v967, %v965
    %v969 = vmul.f32 %v968, %v967
    %v970 = vmul.f32 0.5, %v969
    %v971 = vsub.f32 1.5, %v970
    %v972 = vmul.f32 %v967, %v971
    %vm973 = vweird.f32 %v965
    %vm974 = vweird.f32 %v967
    %vm975 = vmor %vm973, %vm974
    %v976 = vsel %vm975, %v967, %v972
    %v977 = vrsqrt.pop %v966
    %v978 = vmul.f32 %v977, %v966
    %v979 = vmul.f32 %v978, %v977
    %v980 = vmul.f32 0.5, %v979
    %v981 = vsub.f32 1.5, %v980
    %v982 = vmul.f32 %v977, %v981
    %vm983 = vweird.f32 %v966
    %vm984 = vweird.f32 %v977
    %vm985 = vmor %vm983, %vm984
    %v986 = vsel %vm985, %v977, %v982
    %v987 = vmul.f32 %v953, %v976
    %v988 = vmul.f32 %v954, %v986
    %v989 = vperm.slane %v97, 3
    %v990 = vmul.f32 %v987, %v989
    %v991 = vmul.f32 %v988, %v989
    %v992 = vperm.slane %v97, 4
    %v993 = vadd.f32 %v990, %v992
    %v994 = vadd.f32 %v991, %v992
    %s995 = scalar_lea.vmem %s3, 48
    %v996 = vld [vmem:[%s995] sm:$0xff]
    %v997 = vld [vmem:[%s995 + $0x8] sm:$0xf]
    %v998 = vld [vmem:[%s995 + $0xc] sm:$0xff]
    %v999 = vld [vmem:[%s995 + $0x14] sm:$0xf]
    %v1000 = vld [vmem:[%s995 + $0x18] sm:$0xff]
    %v1001 = vld [vmem:[%s995 + $0x20] sm:$0xf]
    %v1002 = vld [vmem:[%s995 + $0x24] sm:$0xff]
    %v1003 = vld [vmem:[%s995 + $0x2c] sm:$0xf]
    %s1004 = scalar_lea.vmem %s5, 16
    %v1005 = vld [vmem:[%s1004] sm:$0xff]
    %v1006 = vld [vmem:[%s1004 + $0x8] sm:$0xff]
    %v1007 = vpack.c.bf16 %v994, %v993
    %v1008 = vperm.slane %v1005, 0
    %v1013 = vunpack.c.l.b16 %v996
    %v1014 = vunpack.c.l.b16 %v998
    %v1015 = vunpack.c.l.b16 %v1000
    %v1016 = vunpack.c.l.b16 %v1002
    %v1017 = vpack.c.b16 %v1014, %v1013
    %v1018 = vpack.c.b16 %v1016, %v1015
    %v1022 = vsel %vm112, %v1007, 0
    %1024 = vmatpush.bf16.msra.mxu0 0
    %1025 = vmatpush.bf16.msra.mxu0 0
    %1026 = vmatpush.bf16.msra.mxu0 0
    %1027 = vmatpush.bf16.msra.mxu0 0
    %1028 = vmatpush.bf16.msra.mxu0 0
    %1029 = vmatpush.bf16.msra.mxu0 0
    %1030 = vmatpush.bf16.msra.mxu0 %v1018
    %1031 = vmatpush.bf16.msra.mxu0 %v1017
    %1032 = vmatmul.bf16.gmra.mxu0 %v1022
    %v1033 = vpop.f32.mrf.mxu0
    %v1034 = vadd.f32 %v1008, %v1033
    %v1035 = vpop.f32.mrf.mxu0
    %v1036 = vadd.f32 %v1008, %v1035
    %1037 = vdwg.mxu0
    %v1038 = vpack.c.bf16 %v1034, %v1034
    %v1039 = vpack.c.bf16 %v1036, %v1036
    %v1042 = vunpack.c.l.b16 %v1038
    %v1043 = vunpack.c.l.b16 %v1039
    %v1044 = vpack.c.b16 %v1042, %v1042
    %v1045 = vpack.c.b16 %v1043, %v1043
    %v1048 = vsel %vm142, %v1038, %v1044
    %v1052 = vsel %vm142, %v1039, %v1045
    %v1054 = vunpack.c.l.bf16 %v1048
    %v1055 = vunpack.c.h.bf16 %v1048
    %v1056 = vunpack.c.l.bf16 %v1052
    %v1057 = vunpack.c.h.bf16 %v1052
    %v1058 = vmul.f32 %v1054, %v164
    %v1059 = vmul.f32 %v1055, %v166
    %v1060 = vmul.f32 %v1054, %v168
    %v1061 = vmul.f32 %v1055, %v170
    %v1062 = vmul.f32 %v1056, %v164
    %v1063 = vmul.f32 %v1057, %v166
    %v1064 = vmul.f32 %v1056, %v168
    %v1065 = vmul.f32 %v1057, %v170
    %v1066 = vpack.c.bf16 %v1058, %v1058
    %v1067 = vpack.c.bf16 %v1059, %v1059
    %v1068 = vpack.c.bf16 %v1060, %v1060
    %v1069 = vpack.c.bf16 %v1061, %v1061
    %v1070 = vpack.c.bf16 %v1062, %v1062
    %v1071 = vpack.c.bf16 %v1063, %v1063
    %v1072 = vpack.c.bf16 %v1064, %v1064
    %v1073 = vpack.c.bf16 %v1065, %v1065
    %v1074 = vmul.f32 %v1054, %v192
    %v1075 = vmul.f32 %v1055, %v194
    %v1076 = vmul.f32 %v1054, %v196
    %v1077 = vmul.f32 %v1055, %v198
    %v1078 = vmul.f32 %v1056, %v192
    %v1079 = vmul.f32 %v1057, %v194
    %v1080 = vmul.f32 %v1056, %v196
    %v1081 = vmul.f32 %v1057, %v198
    %v1082 = vpack.c.bf16 %v1074, %v1074
    %v1083 = vpack.c.bf16 %v1075, %v1075
    %v1084 = vpack.c.bf16 %v1076, %v1076
    %v1085 = vpack.c.bf16 %v1077, %v1077
    %v1086 = vpack.c.bf16 %v1078, %v1078
    %v1087 = vpack.c.bf16 %v1079, %v1079
    %v1088 = vpack.c.bf16 %v1080, %v1080
    %v1089 = vpack.c.bf16 %v1081, %v1081
    %v1094 = vunpack.c.l.b16 %v1066
    %v1095 = vunpack.c.l.b16 %v1067
    %v1096 = vunpack.c.l.b16 %v1068
    %v1097 = vunpack.c.l.b16 %v1069
    %v1098 = vpack.c.b16 %v1095, %v1094
    %v1099 = vpack.c.b16 %v1097, %v1096
    %1100 = vrot.lane.b32.xlu0 %v1098, 96
    %v1101 = vpop.permute.xlu0 %1100
    %1102 = vrot.lane.b32.xlu0 %v1099, 96
    %v1103 = vpop.permute.xlu0 %1102
    %v1104 = vsel %vm112, %v1038, 0
    %v1107 = vsel %vm112, %v1101, 0
    %v1110 = vsel %vm112, %v1103, 0
    %1112 = vmatpush.bf16.xpose.msra.mxu0 0
    %1113 = vmatpush.bf16.xpose.msra.mxu0 0
    %1114 = vmatpush.bf16.xpose.msra.mxu0 0
    %1115 = vmatpush.bf16.xpose.msra.mxu0 0
    %1116 = vmatpush.bf16.xpose.msra.mxu0 0
    %1117 = vmatpush.bf16.xpose.msra.mxu0 0
    %1118 = vmatpush.bf16.xpose.msra.mxu0 %v1110
    %1119 = vmatpush.bf16.xpose.msra.mxu0 %v1107
    %1120 = vmatmul.bf16.gmra.mxu0 %v1104
    %v1121 = vpop.f32.mrf.mxu0
    %v1122 = vadd.f32 0.0, %v1121
    %v1123 = vpop.f32.mrf.mxu0
    %1124 = vdwg.mxu0
    %v1129 = vunpack.c.l.b16 %v1070
    %v1130 = vunpack.c.l.b16 %v1071
    %v1131 = vunpack.c.l.b16 %v1072
    %v1132 = vunpack.c.l.b16 %v1073
    %v1133 = vpack.c.b16 %v1130, %v1129
    %v1134 = vpack.c.b16 %v1132, %v1131
    %1135 = vrot.lane.b32.xlu0 %v1133, 96
    %v1136 = vpop.permute.xlu0 %1135
    %1137 = vrot.lane.b32.xlu0 %v1134, 96
    %v1138 = vpop.permute.xlu0 %1137
    %v1139 = vsel %vm112, %v1039, 0
    %v1142 = vsel %vm112, %v1136, 0
    %v1145 = vsel %vm112, %v1138, 0
    %1147 = vmatpush.bf16.xpose.msra.mxu0 0
    %1148 = vmatpush.bf16.xpose.msra.mxu0 0
    %1149 = vmatpush.bf16.xpose.msra.mxu0 0
    %1150 = vmatpush.bf16.xpose.msra.mxu0 0
    %1151 = vmatpush.bf16.xpose.msra.mxu0 0
    %1152 = vmatpush.bf16.xpose.msra.mxu0 0
    %1153 = vmatpush.bf16.xpose.msra.mxu0 %v1145
    %1154 = vmatpush.bf16.xpose.msra.mxu0 %v1142
    %1155 = vmatmul.bf16.gmra.mxu0 %v1139
    %v1156 = vpop.f32.mrf.mxu0
    %v1157 = vadd.f32 0.0, %v1156
    %v1158 = vpop.f32.mrf.mxu0
    %1159 = vdwg.mxu0
    %v1160 = vsel %vm112, %v1122, -inf
    %1161 = vmax.xlane.f32.xlu0 %v1160
    %v1162 = vpop.xlane.xlu0 %1161
    %v1163 = vsel %vm112, %v1157, -inf
    %1164 = vmax.xlane.f32.xlu0 %v1163
    %v1165 = vpop.xlane.xlu0 %1164
    %v1166 = vsub.f32 %v1122, %v1162
    %v1167 = vsub.f32 %v1157, %v1165
    %v1168 = vmul.f32 %v1166, 1.442695
    %v1169 = vpow.pop %v1168
    %v1170 = vmul.f32 %v1167, 1.442695
    %v1171 = vpow.pop %v1170
    %v1173 = vsel %vm112, %v1169, 0
    %v1176 = vsel %vm112, %v1171, 0
    %1178 = vmatpush.msra.mxu0 0.0
    %1179 = vmatpush.msra.mxu0 0.0
    %1180 = vmatpush.msra.mxu0 0.0
    %1181 = vmatpush.msra.mxu0 0.0
    %1182 = vmatpush.msra.mxu0 0.0
    %1183 = vmatpush.msra.mxu0 0.0
    %1184 = vmatpush.msra.mxu0 0.0
    %1185 = vmatpush.msra.mxu0 0.0
    %1186 = vmatpush.msra.mxu0 0.0
    %1187 = vmatpush.msra.mxu0 0.0
    %1188 = vmatpush.msra.mxu0 0.0
    %1189 = vmatpush.msra.mxu0 0.0
    %1190 = vmatpush.msra.mxu0 %v85
    %1191 = vmatpush.msra.mxu0 %v84
    %1192 = vmatpush.msra.mxu0 %v83
    %1193 = vmatpush.msra.mxu0 %v82
    %1194 = vmatmul.f32.gmra.mxu0 %v1173
    %v1195 = vpop.f32.mrf.mxu0
    %v1196 = vadd.f32 0.0, %v1195
    %1197 = vmatmul.f32.gmra.mxu0 %v1176
    %v1198 = vpop.f32.mrf.mxu0
    %v1199 = vadd.f32 0.0, %v1198
    %1200 = vdwg.mxu0
    %v1201 = vpack.c.bf16 %v1169, %v1169
    %v1202 = vpack.c.bf16 %v1171, %v1171
    %v1207 = vunpack.c.l.b16 %v1082
    %v1208 = vunpack.c.l.b16 %v1083
    %v1209 = vunpack.c.l.b16 %v1084
    %v1210 = vunpack.c.l.b16 %v1085
    %v1211 = vpack.c.b16 %v1208, %v1207
    %v1212 = vpack.c.b16 %v1210, %v1209
    %1213 = vrot.lane.b32.xlu0 %v1211, 64
    %v1214 = vpop.permute.xlu0 %1213
    %1215 = vrot.lane.b32.xlu0 %v1212, 64
    %v1216 = vpop.permute.xlu0 %1215
    %v1220 = vsel %vm112, %v1201, 0
    %1222 = vmatpush.bf16.msra.mxu0 0
    %1223 = vmatpush.bf16.msra.mxu0 0
    %1224 = vmatpush.bf16.msra.mxu0 0
    %1225 = vmatpush.bf16.msra.mxu0 0
    %1226 = vmatpush.bf16.msra.mxu0 0
    %1227 = vmatpush.bf16.msra.mxu0 0
    %1228 = vmatpush.bf16.msra.mxu0 %v1216
    %1229 = vmatpush.bf16.msra.mxu0 %v1214
    %1230 = vmatmul.bf16.gmra.mxu0 %v1220
    %v1231 = vpop.f32.mrf.mxu0
    %v1232 = vadd.f32 0.0, %v1231
    %v1233 = vpop.f32.mrf.mxu0
    %1234 = vdwg.mxu0
    %v1239 = vunpack.c.l.b16 %v1086
    %v1240 = vunpack.c.l.b16 %v1087
    %v1241 = vunpack.c.l.b16 %v1088
    %v1242 = vunpack.c.l.b16 %v1089
    %v1243 = vpack.c.b16 %v1240, %v1239
    %v1244 = vpack.c.b16 %v1242, %v1241
    %1245 = vrot.lane.b32.xlu0 %v1243, 64
    %v1246 = vpop.permute.xlu0 %1245
    %1247 = vrot.lane.b32.xlu0 %v1244, 64
    %v1248 = vpop.permute.xlu0 %1247
    %v1252 = vsel %vm112, %v1202, 0
    %1254 = vmatpush.bf16.msra.mxu0 0
    %1255 = vmatpush.bf16.msra.mxu0 0
    %1256 = vmatpush.bf16.msra.mxu0 0
    %1257 = vmatpush.bf16.msra.mxu0 0
    %1258 = vmatpush.bf16.msra.mxu0 0
    %1259 = vmatpush.bf16.msra.mxu0 0
    %1260 = vmatpush.bf16.msra.mxu0 %v1248
    %1261 = vmatpush.bf16.msra.mxu0 %v1246
    %1262 = vmatmul.bf16.gmra.mxu0 %v1252
    %v1263 = vpop.f32.mrf.mxu0
    %v1264 = vadd.f32 0.0, %v1263
    %v1265 = vpop.f32.mrf.mxu0
    %1266 = vdwg.mxu0
    %v1267 = vrcp.pop %v1196
    %v1268 = vrcp.pop %v1199
    %v1269 = vmul.f32 %v1232, %v1267
    %v1270 = vmul.f32 %v1264, %v1268
    %v1271 = vpack.c.bf16 %v1270, %v1269
    %v1272 = vperm.slane %v1005, 1
    %1273 = vrot.lane.b32.xlu0 %v1017, 32
    %v1274 = vpop.permute.xlu0 %1273
    %1275 = vrot.lane.b32.xlu0 %v1018, 32
    %v1276 = vpop.permute.xlu0 %1275
    %v1280 = vsel %vm112, %v1271, 0
    %1282 = vmatpush.bf16.msra.mxu0 0
    %1283 = vmatpush.bf16.msra.mxu0 0
    %1284 = vmatpush.bf16.msra.mxu0 0
    %1285 = vmatpush.bf16.msra.mxu0 0
    %1286 = vmatpush.bf16.msra.mxu0 0
    %1287 = vmatpush.bf16.msra.mxu0 0
    %1288 = vmatpush.bf16.msra.mxu0 %v1276
    %1289 = vmatpush.bf16.msra.mxu0 %v1274
    %1290 = vmatmul.bf16.gmra.mxu0 %v1280
    %v1291 = vpop.f32.mrf.mxu0
    %v1292 = vadd.f32 %v1272, %v1291
    %v1293 = vpop.f32.mrf.mxu0
    %v1294 = vadd.f32 %v1272, %v1293
    %1295 = vdwg.mxu0
    %v1296 = vadd.f32 %v993, %v1292
    %v1297 = vadd.f32 %v994, %v1294
    %v1298 = vsel %vm112, %v1296, 0.0
    %1299 = vadd.xlane.f32.xlu0 %v1298
    %v1300 = vpop.xlane.xlu0 %1299
    %v1301 = vsel %vm112, %v1297, 0.0
    %1302 = vadd.xlane.f32.xlu0 %v1301
    %v1303 = vpop.xlane.xlu0 %1302
    %v1304 = vmul.f32 %v1300, %v439
    %v1305 = vmul.f32 %v1303, %v439
    %v1306 = vsub.f32 %v1296, %v1304
    %v1307 = vsub.f32 %v1297, %v1305
    %v1308 = vmul.f32 %v1306, %v1306
    %v1309 = vmul.f32 %v1307, %v1307
    %v1310 = vsel %vm112, %v1308, 0.0
    %1311 = vadd.xlane.f32.xlu0 %v1310
    %v1312 = vpop.xlane.xlu0 %1311
    %v1313 = vsel %vm112, %v1309, 0.0
    %1314 = vadd.xlane.f32.xlu0 %v1313
    %v1315 = vpop.xlane.xlu0 %1314
    %v1316 = vmul.f32 %v1312, %v439
    %v1317 = vmul.f32 %v1315, %v439
    %v1318 = vadd.f32 %v1316, 1e-05
    %v1319 = vadd.f32 %v1317, 1e-05
    %v1320 = vrsqrt.pop %v1318
    %v1321 = vmul.f32 %v1320, %v1318
    %v1322 = vmul.f32 %v1321, %v1320
    %v1323 = vmul.f32 0.5, %v1322
    %v1324 = vsub.f32 1.5, %v1323
    %v1325 = vmul.f32 %v1320, %v1324
    %vm1326 = vweird.f32 %v1318
    %vm1327 = vweird.f32 %v1320
    %vm1328 = vmor %vm1326, %vm1327
    %v1329 = vsel %vm1328, %v1320, %v1325
    %v1330 = vrsqrt.pop %v1319
    %v1331 = vmul.f32 %v1330, %v1319
    %v1332 = vmul.f32 %v1331, %v1330
    %v1333 = vmul.f32 0.5, %v1332
    %v1334 = vsub.f32 1.5, %v1333
    %v1335 = vmul.f32 %v1330, %v1334
    %vm1336 = vweird.f32 %v1319
    %vm1337 = vweird.f32 %v1330
    %vm1338 = vmor %vm1336, %vm1337
    %v1339 = vsel %vm1338, %v1330, %v1335
    %v1340 = vmul.f32 %v1306, %v1329
    %v1341 = vmul.f32 %v1307, %v1339
    %v1342 = vperm.slane %v1005, 2
    %v1343 = vmul.f32 %v1340, %v1342
    %v1344 = vmul.f32 %v1341, %v1342
    %v1345 = vperm.slane %v1005, 3
    %v1346 = vadd.f32 %v1343, %v1345
    %v1347 = vadd.f32 %v1344, %v1345
    %v1348 = vpack.c.bf16 %v1347, %v1346
    %v1349 = vperm.slane %v1005, 4
    %v1350 = vunpack.c.h.b16 %v996
    %v1351 = vunpack.c.h.b16 %v998
    %v1352 = vunpack.c.h.b16 %v1000
    %v1353 = vunpack.c.h.b16 %v1002
    %v1354 = vpack.c.b16 %v1351, %v1350
    %v1355 = vpack.c.b16 %v1353, %v1352
    %v1359 = vsel %vm112, %v1348, 0
    %1361 = vmatpush.bf16.msra.mxu0 0
    %1362 = vmatpush.bf16.msra.mxu0 0
    %1363 = vmatpush.bf16.msra.mxu0 0
    %1364 = vmatpush.bf16.msra.mxu0 0
    %1365 = vmatpush.bf16.msra.mxu0 0
    %1366 = vmatpush.bf16.msra.mxu0 0
    %1367 = vmatpush.bf16.msra.mxu0 %v1355
    %1368 = vmatpush.bf16.msra.mxu0 %v1354
    %1369 = vmatmul.bf16.gmra.mxu0 %v1359
    %v1370 = vpop.f32.mrf.mxu0
    %v1371 = vadd.f32 %v1349, %v1370
    %v1372 = vpop.f32.mrf.mxu0
    %v1373 = vadd.f32 %v1349, %v1372
    %1374 = vdwg.mxu0
    %v1375 = vperm.slane %v1005, 5
    %1376 = vrot.lane.b32.xlu0 %v1354, 96
    %v1377 = vpop.permute.xlu0 %1376
    %1378 = vrot.lane.b32.xlu0 %v1355, 96
    %v1379 = vpop.permute.xlu0 %1378
    %1382 = vmatpush.bf16.msra.mxu0 0
    %1383 = vmatpush.bf16.msra.mxu0 0
    %1384 = vmatpush.bf16.msra.mxu0 0
    %1385 = vmatpush.bf16.msra.mxu0 0
    %1386 = vmatpush.bf16.msra.mxu0 0
    %1387 = vmatpush.bf16.msra.mxu0 0
    %1388 = vmatpush.bf16.msra.mxu0 %v1379
    %1389 = vmatpush.bf16.msra.mxu0 %v1377
    %1390 = vmatmul.bf16.gmra.mxu0 %v520
    %v1391 = vpop.f32.mrf.mxu0
    %v1392 = vadd.f32 %v1375, %v1391
    %v1393 = vpop.f32.mrf.mxu0
    %1394 = vdwg.mxu0
    %v1395 = vpack.c.bf16 %v1371, %v1371
    %v1396 = vpack.c.bf16 %v1373, %v1373
    %v1397 = vpack.c.bf16 %v1392, %v1392
    %v1399 = vrot.slane %v1397, 2
    %v1402 = vsel %vm542, %v1397, %v1399
    %v1403 = vsel %vm546, %v1397, %v1399
    %v1405 = vrot.slane %v1403, 2
    %s1406 = scalar_lea.vmem [#allocation1], 1
    %1407 = vst [vmem:[%s1406] ss:$4 sm:$0xff] %v1402
    %v1408 = vld.sshfl [vmem:[#allocation1] sm:$0xff pattern:$0x73625140]
    %s1410 = scalar_lea.vmem [#allocation1], 33
    %1411 = vst [vmem:[%s1410] ss:$4 sm:$0xff] %v1405
    %v1412 = vld.sshfl [vmem:[#allocation1 + $0x20] sm:$0xff pattern:$0x73625140]
    %s1413 = scalar_lea.vmem [#allocation1], 2
    %1414 = vst [vmem:[%s1413] ss:$4 sm:$0xff] %v1402
    %v1415 = vld.sshfl [vmem:[#allocation1] sm:$0xff pattern:$0x73625140]
    %s1416 = scalar_lea.vmem [#allocation1], 34
    %1417 = vst [vmem:[%s1416] ss:$4 sm:$0xff] %v1405
    %v1418 = vld.sshfl [vmem:[#allocation1 + $0x20] sm:$0xff pattern:$0x73625140]
    %s1419 = scalar_lea.vmem [#allocation1], 3
    %1420 = vst [vmem:[%s1419] ss:$4 sm:$0xff] %v1402
    %v1421 = vld.sshfl [vmem:[#allocation1] sm:$0xff pattern:$0x73625140]
    %s1422 = scalar_lea.vmem [#allocation1], 35
    %1423 = vst [vmem:[%s1422] ss:$4 sm:$0xff] %v1405
    %v1424 = vld.sshfl [vmem:[#allocation1 + $0x20] sm:$0xff pattern:$0x73625140]
    %v1425 = vsel %vm542, %v1402, %v1408
    %v1426 = vsel %vm542, %v1405, %v1412
    %v1427 = vsel %vm142, %v1425, %v1415
    %v1428 = vsel %vm142, %v1426, %v1418
    %v1429 = vsel %vm573, %v1427, %v1421
    %v1431 = vsel %vm573, %v1428, %v1424
    %v1433 = vunpack.c.l.bf16 %v1429
    %v1434 = vunpack.c.h.bf16 %v1429
    %v1435 = vunpack.c.l.bf16 %v1431
    %v1436 = vunpack.c.h.bf16 %v1431
    %v1437 = vmul.f32 %v1433, %v582
    %v1438 = vmul.f32 %v1434, %v583
    %v1439 = vmul.f32 %v1435, %v582
    %v1440 = vmul.f32 %v1436, %v583
    %v1441 = vpack.c.bf16 %v1437, %v1437
    %v1442 = vpack.c.bf16 %v1438, %v1438
    %v1443 = vpack.c.bf16 %v1439, %v1439
    %v1444 = vpack.c.bf16 %v1440, %v1440
    %s1445 = scalar_lea.vmem [#allocation1], 1
    %1446 = vst [vmem:[%s1445] ss:$4 sm:$0xff] %v1402
    %v1447 = vld.sshfl [vmem:[#allocation1] sm:$0xff pattern:$0x73625140]
    %s1448 = scalar_lea.vmem [#allocation1], 33
    %1449 = vst [vmem:[%s1448] ss:$4 sm:$0xff] %v1405
    %v1450 = vld.sshfl [vmem:[#allocation1 + $0x20] sm:$0xff pattern:$0x73625140]
    %s1451 = scalar_lea.vmem [#allocation1], 2
    %1452 = vst [vmem:[%s1451] ss:$4 sm:$0xff] %v1402
    %v1453 = vld.sshfl [vmem:[#allocation1] sm:$0xff pattern:$0x73625140]
    %s1454 = scalar_lea.vmem [#allocation1], 34
    %1455 = vst [vmem:[%s1454] ss:$4 sm:$0xff] %v1405
    %v1456 = vld.sshfl [vmem:[#allocation1 + $0x20] sm:$0xff pattern:$0x73625140]
    %s1457 = scalar_lea.vmem [#allocation1], 3
    %1458 = vst [vmem:[%s1457] ss:$4 sm:$0xff] %v1402
    %v1459 = vld.sshfl [vmem:[#allocation1] sm:$0xff pattern:$0x73625140]
    %s1460 = scalar_lea.vmem [#allocation1], 35
    %1461 = vst [vmem:[%s1460] ss:$4 sm:$0xff] %v1405
    %v1462 = vld.sshfl [vmem:[#allocation1 + $0x20] sm:$0xff pattern:$0x73625140]
    %v1463 = vsel %vm542, %v1402, %v1447
    %v1464 = vsel %vm542, %v1405, %v1450
    %v1465 = vsel %vm142, %v1463, %v1453
    %v1466 = vsel %vm142, %v1464, %v1456
    %v1467 = vsel %vm573, %v1465, %v1459
    %v1469 = vsel %vm573, %v1466, %v1462
    %v1471 = vunpack.c.l.bf16 %v1467
    %v1472 = vunpack.c.h.bf16 %v1467
    %v1473 = vunpack.c.l.bf16 %v1469
    %v1474 = vunpack.c.h.bf16 %v1469
    %v1475 = vmul.f32 %v1471, %v625
    %v1476 = vmul.f32 %v1472, %v627
    %v1477 = vmul.f32 %v1473, %v625
    %v1478 = vmul.f32 %v1474, %v627
    %v1479 = vpack.c.bf16 %v1475, %v1475
    %v1480 = vpack.c.bf16 %v1476, %v1476
    %v1481 = vpack.c.bf16 %v1477, %v1477
    %v1482 = vpack.c.bf16 %v1478, %v1478
    %v1485 = vunpack.c.l.b16 %v1441
    %v1486 = vunpack.c.l.b16 %v1442
    %v1487 = vpack.c.b16 %v1486, %v1485
    %v1489 = vsel %vm112, %v1395, 0
    %v1492 = vsel %vm112, %v1487, 0
    %1494 = vmatpush.bf16.xpose.msra.mxu0 0
    %1495 = vmatpush.bf16.xpose.msra.mxu0 0
    %1496 = vmatpush.bf16.xpose.msra.mxu0 0
    %1497 = vmatpush.bf16.xpose.msra.mxu0 0
    %1498 = vmatpush.bf16.xpose.msra.mxu0 0
    %1499 = vmatpush.bf16.xpose.msra.mxu0 0
    %1500 = vmatpush.bf16.xpose.msra.mxu0 0
    %1501 = vmatpush.bf16.xpose.msra.mxu0 %v1492
    %1502 = vmatmul.bf16.gmra.mxu0 %v1489
    %v1503 = vpop.f32.mrf.mxu0
    %v1504 = vadd.f32 0.0, %v1503
    %v1505 = vpop.f32.mrf.mxu0
    %1506 = vdwg.mxu0
    %v1509 = vunpack.c.l.b16 %v1443
    %v1510 = vunpack.c.l.b16 %v1444
    %v1511 = vpack.c.b16 %v1510, %v1509
    %v1513 = vsel %vm112, %v1396, 0
    %v1516 = vsel %vm112, %v1511, 0
    %1518 = vmatpush.bf16.xpose.msra.mxu0 0
    %1519 = vmatpush.bf16.xpose.msra.mxu0 0
    %1520 = vmatpush.bf16.xpose.msra.mxu0 0
    %1521 = vmatpush.bf16.xpose.msra.mxu0 0
    %1522 = vmatpush.bf16.xpose.msra.mxu0 0
    %1523 = vmatpush.bf16.xpose.msra.mxu0 0
    %1524 = vmatpush.bf16.xpose.msra.mxu0 0
    %1525 = vmatpush.bf16.xpose.msra.mxu0 %v1516
    %1526 = vmatmul.bf16.gmra.mxu0 %v1513
    %v1527 = vpop.f32.mrf.mxu0
    %v1528 = vadd.f32 0.0, %v1527
    %v1529 = vpop.f32.mrf.mxu0
    %1530 = vdwg.mxu0
    %v1531 = vsel %vm686, %v1504, -inf
    %1532 = vmax.xlane.f32.xlu0 %v1531
    %v1533 = vpop.xlane.xlu0 %1532
    %v1534 = vsel %vm686, %v1528, -inf
    %1535 = vmax.xlane.f32.xlu0 %v1534
    %v1536 = vpop.xlane.xlu0 %1535
    %v1537 = vsub.f32 %v1504, %v1533
    %v1538 = vsub.f32 %v1528, %v1536
    %v1539 = vmul.f32 %v1537, 1.442695
    %v1540 = vpow.pop %v1539
    %v1541 = vmul.f32 %v1538, 1.442695
    %v1542 = vpow.pop %v1541
    %v1544 = vsel %vm686, %v1540, 0
    %v1547 = vsel %vm686, %v1542, 0
    %1549 = vmatpush.msra.mxu0 0.0
    %1550 = vmatpush.msra.mxu0 0.0
    %1551 = vmatpush.msra.mxu0 0.0
    %1552 = vmatpush.msra.mxu0 0.0
    %1553 = vmatpush.msra.mxu0 0.0
    %1554 = vmatpush.msra.mxu0 0.0
    %1555 = vmatpush.msra.mxu0 0.0
    %1556 = vmatpush.msra.mxu0 0.0
    %1557 = vmatpush.msra.mxu0 0.0
    %1558 = vmatpush.msra.mxu0 0.0
    %1559 = vmatpush.msra.mxu0 0.0
    %1560 = vmatpush.msra.mxu0 0.0
    %1561 = vmatpush.msra.mxu0 0.0
    %1562 = vmatpush.msra.mxu0 0.0
    %1563 = vmatpush.msra.mxu0 %v87
    %1564 = vmatpush.msra.mxu0 %v86
    %1565 = vmatmul.f32.gmra.mxu0 %v1544
    %v1566 = vpop.f32.mrf.mxu0
    %v1567 = vadd.f32 0.0, %v1566
    %1568 = vmatmul.f32.gmra.mxu0 %v1547
    %v1569 = vpop.f32.mrf.mxu0
    %v1570 = vadd.f32 0.0, %v1569
    %1571 = vdwg.mxu0
    %v1572 = vpack.c.bf16 %v1540, %v1540
    %v1573 = vpack.c.bf16 %v1542, %v1542
    %v1576 = vunpack.c.l.b16 %v1479
    %v1577 = vunpack.c.l.b16 %v1480
    %v1578 = vpack.c.b16 %v1577, %v1576
    %1579 = vrot.lane.b32.xlu0 %v1578, 96
    %v1580 = vpop.permute.xlu0 %1579
    %v1583 = vsel %vm686, %v1572, 0
    %1585 = vmatpush.bf16.msra.mxu0 0
    %1586 = vmatpush.bf16.msra.mxu0 0
    %1587 = vmatpush.bf16.msra.mxu0 0
    %1588 = vmatpush.bf16.msra.mxu0 0
    %1589 = vmatpush.bf16.msra.mxu0 0
    %1590 = vmatpush.bf16.msra.mxu0 0
    %1591 = vmatpush.bf16.msra.mxu0 0
    %1592 = vmatpush.bf16.msra.mxu0 %v1580
    %1593 = vmatmul.bf16.gmra.mxu0 %v1583
    %v1594 = vpop.f32.mrf.mxu0
    %v1595 = vadd.f32 0.0, %v1594
    %v1596 = vpop.f32.mrf.mxu0
    %1597 = vdwg.mxu0
    %v1600 = vunpack.c.l.b16 %v1481
    %v1601 = vunpack.c.l.b16 %v1482
    %v1602 = vpack.c.b16 %v1601, %v1600
    %1603 = vrot.lane.b32.xlu0 %v1602, 96
    %v1604 = vpop.permute.xlu0 %1603
    %v1607 = vsel %vm686, %v1573, 0
    %1609 = vmatpush.bf16.msra.mxu0 0
    %1610 = vmatpush.bf16.msra.mxu0 0
    %1611 = vmatpush.bf16.msra.mxu0 0
    %1612 = vmatpush.bf16.msra.mxu0 0
    %1613 = vmatpush.bf16.msra.mxu0 0
    %1614 = vmatpush.bf16.msra.mxu0 0
    %1615 = vmatpush.bf16.msra.mxu0 0
    %1616 = vmatpush.bf16.msra.mxu0 %v1604
    %1617 = vmatmul.bf16.gmra.mxu0 %v1607
    %v1618 = vpop.f32.mrf.mxu0
    %v1619 = vadd.f32 0.0, %v1618
    %v1620 = vpop.f32.mrf.mxu0
    %1621 = vdwg.mxu0
    %v1622 = vrcp.pop %v1567
    %v1623 = vrcp.pop %v1570
    %v1624 = vmul.f32 %v1595, %v1622
    %v1625 = vmul.f32 %v1619, %v1623
    %v1626 = vpack.c.bf16 %v1625, %v1624
    %v1627 = vperm.slane %v1005, 6
    %1628 = vrot.lane.b32.xlu0 %v1354, 32
    %v1629 = vpop.permute.xlu0 %1628
    %1630 = vrot.lane.b32.xlu0 %v1355, 32
    %v1631 = vpop.permute.xlu0 %1630
    %v1635 = vsel %vm112, %v1626, 0
    %1637 = vmatpush.bf16.msra.mxu0 0
    %1638 = vmatpush.bf16.msra.mxu0 0
    %1639 = vmatpush.bf16.msra.mxu0 0
    %1640 = vmatpush.bf16.msra.mxu0 0
    %1641 = vmatpush.bf16.msra.mxu0 0
    %1642 = vmatpush.bf16.msra.mxu0 0
    %1643 = vmatpush.bf16.msra.mxu0 %v1631
    %1644 = vmatpush.bf16.msra.mxu0 %v1629
    %1645 = vmatmul.bf16.gmra.mxu0 %v1635
    %v1646 = vpop.f32.mrf.mxu0
    %v1647 = vadd.f32 %v1627, %v1646
    %v1648 = vpop.f32.mrf.mxu0
    %v1649 = vadd.f32 %v1627, %v1648
    %1650 = vdwg.mxu0
    %v1651 = vadd.f32 %v1346, %v1647
    %v1652 = vadd.f32 %v1347, %v1649
    %v1653 = vsel %vm112, %v1651, 0.0
    %1654 = vadd.xlane.f32.xlu0 %v1653
    %v1655 = vpop.xlane.xlu0 %1654
    %v1656 = vsel %vm112, %v1652, 0.0
    %1657 = vadd.xlane.f32.xlu0 %v1656
    %v1658 = vpop.xlane.xlu0 %1657
    %v1659 = vmul.f32 %v1655, %v439
    %v1660 = vmul.f32 %v1658, %v439
    %v1661 = vsub.f32 %v1651, %v1659
    %v1662 = vsub.f32 %v1652, %v1660
    %v1663 = vmul.f32 %v1661, %v1661
    %v1664 = vmul.f32 %v1662, %v1662
    %v1665 = vsel %vm112, %v1663, 0.0
    %1666 = vadd.xlane.f32.xlu0 %v1665
    %v1667 = vpop.xlane.xlu0 %1666
    %v1668 = vsel %vm112, %v1664, 0.0
    %1669 = vadd.xlane.f32.xlu0 %v1668
    %v1670 = vpop.xlane.xlu0 %1669
    %v1671 = vmul.f32 %v1667, %v439
    %v1672 = vmul.f32 %v1670, %v439
    %v1673 = vadd.f32 %v1671, 1e-05
    %v1674 = vadd.f32 %v1672, 1e-05
    %v1675 = vrsqrt.pop %v1673
    %v1676 = vmul.f32 %v1675, %v1673
    %v1677 = vmul.f32 %v1676, %v1675
    %v1678 = vmul.f32 0.5, %v1677
    %v1679 = vsub.f32 1.5, %v1678
    %v1680 = vmul.f32 %v1675, %v1679
    %vm1681 = vweird.f32 %v1673
    %vm1682 = vweird.f32 %v1675
    %vm1683 = vmor %vm1681, %vm1682
    %v1684 = vsel %vm1683, %v1675, %v1680
    %v1685 = vrsqrt.pop %v1674
    %v1686 = vmul.f32 %v1685, %v1674
    %v1687 = vmul.f32 %v1686, %v1685
    %v1688 = vmul.f32 0.5, %v1687
    %v1689 = vsub.f32 1.5, %v1688
    %v1690 = vmul.f32 %v1685, %v1689
    %vm1691 = vweird.f32 %v1674
    %vm1692 = vweird.f32 %v1685
    %vm1693 = vmor %vm1691, %vm1692
    %v1694 = vsel %vm1693, %v1685, %v1690
    %v1695 = vmul.f32 %v1661, %v1684
    %v1696 = vmul.f32 %v1662, %v1694
    %v1697 = vperm.slane %v1005, 7
    %v1698 = vmul.f32 %v1695, %v1697
    %v1699 = vmul.f32 %v1696, %v1697
    %v1700 = vperm.slane %v1006, 0
    %v1701 = vadd.f32 %v1698, %v1700
    %v1702 = vadd.f32 %v1699, %v1700
    %v1703 = vpack.c.bf16 %v1702, %v1701
    %v1704 = vperm.slane %v1006, 1
    %v1709 = vunpack.c.l.b16 %v997
    %v1710 = vunpack.c.l.b16 %v999
    %v1711 = vunpack.c.l.b16 %v1001
    %v1712 = vunpack.c.l.b16 %v1003
    %v1713 = vpack.c.b16 %v1710, %v1709
    %v1714 = vpack.c.b16 %v1712, %v1711
    %v1718 = vsel %vm112, %v1703, 0
    %1720 = vmatpush.bf16.msra.mxu0 0
    %1721 = vmatpush.bf16.msra.mxu0 0
    %1722 = vmatpush.bf16.msra.mxu0 0
    %1723 = vmatpush.bf16.msra.mxu0 0
    %1724 = vmatpush.bf16.msra.mxu0 0
    %1725 = vmatpush.bf16.msra.mxu0 0
    %1726 = vmatpush.bf16.msra.mxu0 %v1714
    %1727 = vmatpush.bf16.msra.mxu0 %v1713
    %1728 = vmatmul.bf16.gmra.mxu0 %v1718
    %v1729 = vpop.f32.mrf.mxu0
    %v1730 = vadd.f32 %v1704, %v1729
    %v1731 = vpop.f32.mrf.mxu0
    %v1732 = vadd.f32 %v1704, %v1731
    %1733 = vdwg.mxu0
    %v1734 = vmax.f32 %v1730, 0.0
    %v1735 = vmax.f32 %v1732, 0.0
    %s1736 = scalar_lea.vmem %s4, 32
    %v1737 = vld [vmem:[%s1736] sm:$0xf]
    %v1738 = vld [vmem:[%s1736 + $0x4] sm:$0xf]
    %v1739 = vld [vmem:[%s1736 + $0x8] sm:$0xf]
    %v1740 = vld [vmem:[%s1736 + $0xc] sm:$0xf]
    %v1741 = vld [vmem:[%s1736 + $0x10] sm:$0xf]
    %v1742 = vld [vmem:[%s1736 + $0x14] sm:$0xf]
    %v1743 = vld [vmem:[%s1736 + $0x18] sm:$0xf]
    %v1744 = vld [vmem:[%s1736 + $0x1c] sm:$0xf]
    %v1745 = vpack.c.bf16 %v1735, %v1734
    %v1746 = vperm.slane %v1006, 2
    %v1755 = vunpack.c.l.b16 %v1737
    %v1756 = vunpack.c.l.b16 %v1738
    %v1757 = vunpack.c.l.b16 %v1739
    %v1758 = vunpack.c.l.b16 %v1740
    %v1759 = vunpack.c.l.b16 %v1741
    %v1760 = vunpack.c.l.b16 %v1742
    %v1761 = vunpack.c.l.b16 %v1743
    %v1762 = vunpack.c.l.b16 %v1744
    %v1763 = vpack.c.b16 %v1756, %v1755
    %v1764 = vpack.c.b16 %v1758, %v1757
    %v1765 = vpack.c.b16 %v1760, %v1759
    %v1766 = vpack.c.b16 %v1762, %v1761
    %v1772 = vsel %vm51, %v1745, 0
    %1774 = vmatpush.bf16.msra.mxu0 0
    %1775 = vmatpush.bf16.msra.mxu0 0
    %1776 = vmatpush.bf16.msra.mxu0 0
    %1777 = vmatpush.bf16.msra.mxu0 0
    %1778 = vmatpush.bf16.msra.mxu0 %v1766
    %1779 = vmatpush.bf16.msra.mxu0 %v1765
    %1780 = vmatpush.bf16.msra.mxu0 %v1764
    %1781 = vmatpush.bf16.msra.mxu0 %v1763
    %1782 = vmatmul.bf16.gmra.mxu0 %v1772
    %v1783 = vpop.f32.mrf.mxu0
    %v1784 = vadd.f32 %v1746, %v1783
    %v1785 = vpop.f32.mrf.mxu0
    %v1786 = vadd.f32 %v1746, %v1785
    %1787 = vdwg.mxu0
    %v1788 = vadd.f32 %v1701, %v1784
    %v1789 = vadd.f32 %v1702, %v1786
    %v1790 = vsel %vm112, %v1788, 0.0
    %1791 = vadd.xlane.f32.xlu0 %v1790
    %v1792 = vpop.xlane.xlu0 %1791
    %v1793 = vsel %vm112, %v1789, 0.0
    %1794 = vadd.xlane.f32.xlu0 %v1793
    %v1795 = vpop.xlane.xlu0 %1794
    %v1796 = vmul.f32 %v1792, %v439
    %v1797 = vmul.f32 %v1795, %v439
    %v1798 = vsub.f32 %v1788, %v1796
    %v1799 = vsub.f32 %v1789, %v1797
    %v1800 = vmul.f32 %v1798, %v1798
    %v1801 = vmul.f32 %v1799, %v1799
    %v1802 = vsel %vm112, %v1800, 0.0
    %1803 = vadd.xlane.f32.xlu0 %v1802
    %v1804 = vpop.xlane.xlu0 %1803
    %v1805 = vsel %vm112, %v1801, 0.0
    %1806 = vadd.xlane.f32.xlu0 %v1805
    %v1807 = vpop.xlane.xlu0 %1806
    %v1808 = vmul.f32 %v1804, %v439
    %v1809 = vmul.f32 %v1807, %v439
    %v1810 = vadd.f32 %v1808, 1e-05
    %v1811 = vadd.f32 %v1809, 1e-05
    %v1812 = vrsqrt.pop %v1810
    %v1813 = vmul.f32 %v1812, %v1810
    %v1814 = vmul.f32 %v1813, %v1812
    %v1815 = vmul.f32 0.5, %v1814
    %v1816 = vsub.f32 1.5, %v1815
    %v1817 = vmul.f32 %v1812, %v1816
    %vm1818 = vweird.f32 %v1810
    %vm1819 = vweird.f32 %v1812
    %vm1820 = vmor %vm1818, %vm1819
    %v1821 = vsel %vm1820, %v1812, %v1817
    %v1822 = vrsqrt.pop %v1811
    %v1823 = vmul.f32 %v1822, %v1811
    %v1824 = vmul.f32 %v1823, %v1822
    %v1825 = vmul.f32 0.5, %v1824
    %v1826 = vsub.f32 1.5, %v1825
    %v1827 = vmul.f32 %v1822, %v1826
    %vm1828 = vweird.f32 %v1811
    %vm1829 = vweird.f32 %v1822
    %vm1830 = vmor %vm1828, %vm1829
    %v1831 = vsel %vm1830, %v1822, %v1827
    %v1832 = vmul.f32 %v1798, %v1821
    %v1833 = vmul.f32 %v1799, %v1831
    %v1834 = vperm.slane %v1006, 3
    %v1835 = vmul.f32 %v1832, %v1834
    %v1836 = vmul.f32 %v1833, %v1834
    %v1837 = vperm.slane %v1006, 4
    %v1838 = vadd.f32 %v1835, %v1837
    %v1839 = vadd.f32 %v1836, %v1837
    %v1840 = vld [vmem:[%s3 + $0x8] sm:$0xf]
    %v1841 = vld [vmem:[%s3 + $0x14] sm:$0xf]
    %v1842 = vld [vmem:[%s3 + $0x20] sm:$0xf]
    %v1843 = vld [vmem:[%s3 + $0x2c] sm:$0xf]
    %v1844 = vld [vmem:[%s5 + $0x8] sm:$0xff]
    %v1845 = vpack.c.bf16 %v1839, %v1838
    %v1846 = vperm.slane %v1844, 5
    %v1851 = vunpack.c.l.b16 %v1840
    %v1852 = vunpack.c.l.b16 %v1841
    %v1853 = vunpack.c.l.b16 %v1842
    %v1854 = vunpack.c.l.b16 %v1843
    %v1855 = vpack.c.b16 %v1852, %v1851
    %v1856 = vpack.c.b16 %v1854, %v1853
    %1857 = vrot.lane.b32.xlu0 %v1855, 64
    %v1858 = vpop.permute.xlu0 %1857
    %1859 = vrot.lane.b32.xlu0 %v1856, 64
    %v1860 = vpop.permute.xlu0 %1859
    %v1864 = vsel %vm112, %v1845, 0
    %1866 = vmatpush.bf16.msra.mxu0 0
    %1867 = vmatpush.bf16.msra.mxu0 0
    %1868 = vmatpush.bf16.msra.mxu0 0
    %1869 = vmatpush.bf16.msra.mxu0 0
    %1870 = vmatpush.bf16.msra.mxu0 0
    %1871 = vmatpush.bf16.msra.mxu0 0
    %1872 = vmatpush.bf16.msra.mxu0 %v1860
    %1873 = vmatpush.bf16.msra.mxu0 %v1858
    %1874 = vmatmul.bf16.gmra.mxu0 %v1864
    %v1875 = vpop.f32.mrf.mxu0
    %v1876 = vadd.f32 %v1846, %v1875
    %v1877 = vpop.f32.mrf.mxu0
    %v1878 = vadd.f32 %v1846, %v1877
    %1879 = vdwg.mxu0
    %1880 = vst.msk [vmem:[#allocation2] sm:$0xff] %vm51, %v1876
    %1881 = vst.msk [vmem:[#allocation2 + $0x8] sm:$0xff] %vm51, %v1878
    // Predicated region
    $region26: #{tpu_custom_call.1} parent=1 // pred_check
      _
    $region27: #{tpu_custom_call.1} parent=1 // pred_check_branch
      %1883 = sbr.rel (0) target = $region29
    $region28: #{tpu_custom_call.1} parent=1 // pred_region
      %1885 = vsyncadd [#allocation3], 0
      %s1886 = sshll.u32 [#allocation2], 4
      %s1887 = int_to_ptr.vmem [resolvable:$true] %s1886
      %s1888 = sshll.u32 %s6, 4
      %s1889 = int_to_ptr.hbm [resolvable:$true] %s1888
      %1894 = dma.vmem_to_hbm [thread:$0]  %s1887, 256, %s1889, [#allocation3], 128, 128, 8
    $region29: #{tpu_custom_call.1} parent=1 // pred_fallthru
      _
    // Predicated region
    $region30: #{tpu_custom_call.1} parent=1 // pred_check
      _
    $region31: #{tpu_custom_call.1} parent=1 // pred_check_branch
      %1896 = sbr.rel (0) target = $region33
    $region32: #{tpu_custom_call.1} parent=1 // pred_region
      %1898 = dma.done [#allocation3], 256
    $region33: #{tpu_custom_call.1} parent=1 // pred_fallthru
      _
    %1899 = vsyncpa [#allocation3], 1

</llo_original>
